<compile_context>
chip_gen: v7x
topology: tpu7x:2x2x1
jax: 0.10.0
libtpu: 0.0.40
codegen_flags: <defaults>
</compile_context>

<pallas_src>
import functools

import jax
import jax.numpy as jnp
from jax import lax
from jax.experimental import pallas as pl
from jax.experimental.pallas import tpu as pltpu

IN_FEATURES = 768
HIDDEN = 1024
NUM_CLASSES = 128            # stand-in for len(os.listdir(EMBEDS))
BN_EPS = 1e-5
DEFAULT_BLOCK_B = 1024       # batch rows per tile


def _round_up(x, m):
    return ((x + m - 1) // m) * m


def _vmem_limit_bytes(tb, c_pad, x_itemsize):
    """Per-tile footprint (double-buffered I/O + f32 temporaries) with margin."""
    pass1 = (2 * (tb * IN_FEATURES * x_itemsize      # x tile
                  + tb * HIDDEN * 2                  # bf16 h stash tile
                  + 2 * HIDDEN * 4)                  # per-tile stats
             + 2 * IN_FEATURES * HIDDEN * 2          # resident w1 (bf16)
             + 4 * tb * HIDDEN * 4)                  # f32 temps (h, centered, sq)
    pass2 = (2 * (tb * HIDDEN * 2                    # h tile
                  + tb * c_pad * 4)                  # out tile
             + 2 * (HIDDEN * c_pad * 2 + c_pad * 4   # resident w2 / b2
                    + 2 * HIDDEN * 4)                # scale / shift
             + 2 * tb * HIDDEN * 4)                  # f32 temps
    need = max(pass1, pass2) + (4 << 20)
    return int(max(40 << 20, min(_round_up(need, 1 << 20), 56 << 20)))


# ---------- pass 1: h = x @ w1 stash + per-tile BN partial statistics --------
def _stats_kernel(x_ref, w1_ref, h_ref, stats_ref, *, n_rows, tb, ragged):
    # bf16 MXU operands, f32 accumulation.  Cast x in-kernel (hides under the
    # MXU-bound matmul) instead of a wrapper-side HBM pass.
    h = jnp.dot(x_ref[...].astype(jnp.bfloat16), w1_ref[...],
                preferred_element_type=jnp.float32)
    # Stash bf16 h for pass 2 (avoids recomputing x @ w1 there).
    h_ref[...] = h.astype(jnp.bfloat16)

    # Per-tile sum and mean-centered sum-of-squares (Chan parallel-variance
    # partials).  Sublane reductions ride the XLU, which is idle in this
    # MXU-bound kernel.  For a ragged final tile, mask padding rows (their
    # contents are unspecified) before reducing.
    if ragged:
        rows_left = n_rows - pl.program_id(0) * tb
        row_ids = lax.broadcasted_iota(jnp.int32, (tb, 1), 0)
        mask = row_ids < rows_left
        hm = jnp.where(mask, h, 0.0)
        s = jnp.sum(hm, axis=0, keepdims=True)                 # (1, HIDDEN)
        cnt = jnp.minimum(rows_left, tb).astype(jnp.float32)
        hc = jnp.where(mask, hm - s / cnt, 0.0)
    else:
        s = jnp.sum(h, axis=0, keepdims=True)                  # (1, HIDDEN)
        hc = h - s * (1.0 / float(tb))
    m2 = jnp.sum(hc * hc, axis=0, keepdims=True)               # (1, HIDDEN)
    stats_ref[0:1, :] = s
    stats_ref[1:2, :] = m2


# ---------- pass 2: fused BN(scale,shift) + ReLU + Linear2 -------------------
def _mlp_kernel(h_ref, scale_ref, shift_ref, w2_ref, b2_ref, out_ref):
    h = h_ref[...].astype(jnp.float32)
    # BatchNorm folded into one FMA per element, then ReLU.
    y = jnp.maximum(h * scale_ref[...] + shift_ref[...], 0.0)
    o = jnp.dot(y.astype(jnp.bfloat16), w2_ref[...],
                preferred_element_type=jnp.float32)
    out_ref[...] = (o + b2_ref[...]).astype(out_ref.dtype)


def mlp_forward(x, w1, b1, gamma, beta, w2, b2, *,
                block_b=DEFAULT_BLOCK_B, out_dtype=jnp.float32):
    """x: (..., 768) -> logits (N, num_classes). Training-mode BatchNorm."""
    del b1  # Linear-1 bias is cancelled exactly by BN's batch-mean subtraction.

    xb = x.reshape(-1, IN_FEATURES)
    n = xb.shape[0]
    c = w2.shape[1]

    # Batch tile: single full-extent tile for small batches (no divisibility
    # constraints at all); otherwise a multiple of 16 so bf16 (h stash) blocks
    # stay sublane-legal.  No wrapper-side padding of x is needed: Pallas
    # boundary blocks handle the ragged last tile and the kernel masks it.
    if n <= block_b:
        tb = n
    else:
        tb = max(16, _round_up(min(block_b, n), 16))
    n_tiles = pl.cdiv(n, tb)
    ragged = (n % tb) != 0

    # Lane-dense class padding; 256-aligned above 128 (v6e/v7x MXU is 256 wide).
    c_pad = _round_up(c, 128) if c <= 128 else _round_up(c, 256)

    w1_bf = w1.astype(jnp.bfloat16)
    if c_pad == c:
        w2_bf = w2.astype(jnp.bfloat16)
        b2_p = b2.reshape(1, c).astype(jnp.float32)
    else:
        w2_bf = jnp.zeros((HIDDEN, c_pad), jnp.bfloat16).at[:, :c].set(
            w2.astype(jnp.bfloat16))
        b2_p = jnp.zeros((1, c_pad), jnp.float32).at[:, :c].set(
            b2.reshape(1, c).astype(jnp.float32))

    cparams = pltpu.CompilerParams(
        dimension_semantics=("parallel",),
        vmem_limit_bytes=_vmem_limit_bytes(tb, c_pad, xb.dtype.itemsize))

    # ---- pass 1: h stash + per-tile partial batch statistics ----------------
    stats_kernel = functools.partial(_stats_kernel, n_rows=n, tb=tb, ragged=ragged)
    h_stash, stats = pl.pallas_call(
        stats_kernel,
        out_shape=(jax.ShapeDtypeStruct((n, HIDDEN), jnp.bfloat16),
                   jax.ShapeDtypeStruct((n_tiles, 2, HIDDEN), jnp.float32)),
        grid=(n_tiles,),
        in_specs=[
            pl.BlockSpec((tb, IN_FEATURES), lambda t: (t, 0)),
            pl.BlockSpec((IN_FEATURES, HIDDEN), lambda t: (0, 0)),   # resident
        ],
        out_specs=(
            pl.BlockSpec((tb, HIDDEN), lambda t: (t, 0)),
            pl.BlockSpec((None, 2, HIDDEN), lambda t: (t, 0, 0)),
        ),
        compiler_params=cparams,
    )(xb, w1_bf)

    # ---- exact global training-mode BN stats (Chan parallel-variance) -------
    counts = jnp.asarray([min(tb, n - i * tb) for i in range(n_tiles)],
                         jnp.float32).reshape(n_tiles, 1)
    tile_sum = stats[:, 0, :]                        # (n_tiles, HIDDEN)
    tile_m2 = stats[:, 1, :]                         # (n_tiles, HIDDEN)
    mean = jnp.sum(tile_sum, axis=0) / n
    tile_mean = tile_sum / counts
    m2 = jnp.sum(tile_m2, axis=0) + jnp.sum(counts * (tile_mean - mean) ** 2, axis=0)
    var = jnp.maximum(m2 / n, 0.0)                   # biased variance (PyTorch BN)
    # NOTE: stats are computed from bf16-rounded h (bf16 MXU operands); this
    # trades a little parity vs an f32 PyTorch reference for MXU throughput.
    scale = gamma.astype(jnp.float32) * lax.rsqrt(var + BN_EPS)
    shift = beta.astype(jnp.float32) - mean * scale

    # ---- pass 2: normalize + ReLU + Linear2 ----------------------------------
    out = pl.pallas_call(
        _mlp_kernel,
        out_shape=jax.ShapeDtypeStruct((n, c_pad), out_dtype),
        grid=(n_tiles,),
        in_specs=[
            pl.BlockSpec((tb, HIDDEN), lambda t: (t, 0)),            # h stash
            pl.BlockSpec((1, HIDDEN), lambda t: (0, 0)),             # scale
            pl.BlockSpec((1, HIDDEN), lambda t: (0, 0)),             # shift
            pl.BlockSpec((HIDDEN, c_pad), lambda t: (0, 0)),         # resident
            pl.BlockSpec((1, c_pad), lambda t: (0, 0)),              # b2
        ],
        out_specs=pl.BlockSpec((tb, c_pad), lambda t: (t, 0)),
        compiler_params=cparams,
    )(h_stash, scale.reshape(1, HIDDEN), shift.reshape(1, HIDDEN), w2_bf, b2_p)

    return out if c_pad == c else out[:, :c]


def init_params(key):
    k1, k2, k3, k4 = jax.random.split(key, 4)
    # PyTorch Linear default: U(-1/sqrt(fan_in), 1/sqrt(fan_in))
    bound1 = 1.0 / (IN_FEATURES ** 0.5)
    bound2 = 1.0 / (HIDDEN ** 0.5)
    w1 = jax.random.uniform(k1, (IN_FEATURES, HIDDEN), jnp.float32, -bound1, bound1)
    b1 = jax.random.uniform(k2, (HIDDEN,), jnp.float32, -bound1, bound1)
    w2 = jax.random.uniform(k3, (HIDDEN, NUM_CLASSES), jnp.float32, -bound2, bound2)
    b2 = jax.random.uniform(k4, (NUM_CLASSES,), jnp.float32, -bound2, bound2)
    gamma = jnp.ones((HIDDEN,), jnp.float32)   # BatchNorm1d default affine
    beta = jnp.zeros((HIDDEN,), jnp.float32)
    return w1, b1, gamma, beta, w2, b2


def mlp_reference(x, w1, b1, gamma, beta, w2, b2):
    """Pure-JAX reference mirroring the PyTorch module (training-mode BN)."""
    xb = x.reshape(-1, IN_FEATURES).astype(jnp.float32)
    h = xb @ w1 + b1
    mean = jnp.mean(h, axis=0)
    var = jnp.mean((h - mean) ** 2, axis=0)
    h = (h - mean) * lax.rsqrt(var + BN_EPS) * gamma + beta
    h = jnp.maximum(h, 0.0)
    return h @ w2 + b2


if __name__ == "__main__":
    key = jax.random.PRNGKey(0)
    kx, kp, kx2 = jax.random.split(key, 3)

    params = init_params(kp)

    # Small example input; forward reshapes (-1, 768) -> (8, 768): single tile.
    x = jax.random.normal(kx, (2, 4, IN_FEATURES), jnp.float32)
    out = mlp_forward(x, *params)
    jax.block_until_ready(out)
    assert out.shape == (8, NUM_CLASSES), out.shape
    ref = mlp_reference(x, *params)
    max_err = float(jnp.max(jnp.abs(out - ref)))
    assert max_err < 1e-1, max_err

    # Multi-tile + ragged-final-tile path (in-kernel masking + Chan combine)
    # exercised with a small tile override.
    x2 = jax.random.normal(kx2, (72, IN_FEATURES), jnp.float32)
    out2 = mlp_forward(x2, *params, block_b=32)
    jax.block_until_ready(out2)
    assert out2.shape == (72, NUM_CLASSES), out2.shape
    ref2 = mlp_reference(x2, *params)
    max_err2 = float(jnp.max(jnp.abs(out2 - ref2)))
    assert max_err2 < 1e-1, max_err2

    print("KERNEL_OK")
</pallas_src>

<mosaic_0001>
module attributes {stable_mosaic.version = 11 : i64} {
  func.func @_stats_kernel(%arg0: i32, %arg1: memref<8x768xf32, #tpu.memory_space<vmem>>, %arg2: memref<768x1024xbf16, #tpu.memory_space<vmem>>, %arg3: memref<8x1024xbf16, #tpu.memory_space<vmem>>, %arg4: memref<1x2x1024xf32, #tpu.memory_space<vmem>>) attributes {dimension_semantics = [#tpu.dimension_semantics<parallel>], iteration_bounds = array<i64: 1>, scalar_prefetch = 0 : i64, scratch_operands = 0 : i64, tpu.core_type = #tpu.core_type<tc>, window_params = [{transform_indices = @transform_0, window_bounds = array<i64: 8, 768>}, {pipeline_mode = #tpu.pipeline_mode<synchronous>, transform_indices = @transform_1, window_bounds = array<i64: 768, 1024>}, {transform_indices = @transform_2, window_bounds = array<i64: 8, 1024>}, {transform_indices = @transform_3, window_bounds = array<i64: 1, 2, 1024>}]} {
    %c0 = arith.constant 0 : index
    %c0_0 = arith.constant 0 : index
    %0 = vector.load %arg1[%c0, %c0_0] : memref<8x768xf32, #tpu.memory_space<vmem>>, vector<8x768xf32>
    %1 = arith.truncf %0 : vector<8x768xf32> to vector<8x768xbf16>
    %c0_1 = arith.constant 0 : index
    %c0_2 = arith.constant 0 : index
    %2 = vector.load %arg2[%c0_1, %c0_2] : memref<768x1024xbf16, #tpu.memory_space<vmem>>, vector<768x1024xbf16>
    %cst = arith.constant dense<0.000000e+00> : vector<8x1024xf32>
    %3 = tpu.matmul %1, %2, %cst {dimension_numbers = #tpu.dot_dimension_numbers<[1], [0], [0], [1], [0, 0, 1, 1], [], []>} : vector<8x768xbf16>, vector<768x1024xbf16>, vector<8x1024xf32> -> vector<8x1024xf32>
    %4 = arith.truncf %3 : vector<8x1024xf32> to vector<8x1024xbf16>
    %c0_3 = arith.constant 0 : index
    %c0_4 = arith.constant 0 : index
    %5 = vector.load %arg3[%c0_3, %c0_4] : memref<8x1024xbf16, #tpu.memory_space<vmem>>, vector<8x1024xbf16>
    tpu.vector_store %arg3[%c0_3, %c0_4], %4 {strides = array<i32>} : memref<8x1024xbf16, #tpu.memory_space<vmem>>, vector<8x1024xbf16>,
    %cst_5 = arith.constant dense<0.000000e+00> : vector<1024xf32>
    %6 = vector.multi_reduction <add>, %3, %cst_5 [0] : vector<8x1024xf32> to vector<1024xf32>
    %7 = vector.shape_cast %6 : vector<1024xf32> to vector<1x1024xf32>
    %cst_6 = arith.constant 1.250000e-01 : f32
    %8 = vector.broadcast %cst_6 : f32 to vector<1x1024xf32>
    %9 = arith.mulf %7, %8 : vector<1x1024xf32>
    %10 = vector.broadcast %9 : vector<1x1024xf32> to vector<8x1024xf32>
    %11 = arith.subf %3, %10 : vector<8x1024xf32>
    %12 = arith.mulf %11, %11 : vector<8x1024xf32>
    %cst_7 = arith.constant dense<0.000000e+00> : vector<1024xf32>
    %13 = vector.multi_reduction <add>, %12, %cst_7 [0] : vector<8x1024xf32> to vector<1024xf32>
    %14 = vector.shape_cast %13 : vector<1024xf32> to vector<1x1024xf32>
    %c0_8 = arith.constant 0 : index
    %c0_9 = arith.constant 0 : index
    %c0_10 = arith.constant 0 : index
    %15 = vector.load %arg4[%c0_8, %c0_9, %c0_10] : memref<1x2x1024xf32, #tpu.memory_space<vmem>>, vector<1x1x1024xf32>
    %16 = vector.shape_cast %15 : vector<1x1x1024xf32> to vector<1x1024xf32>
    %17 = vector.shape_cast %7 : vector<1x1024xf32> to vector<1x1x1024xf32>
    tpu.vector_store %arg4[%c0_8, %c0_9, %c0_10], %17 {strides = array<i32>} : memref<1x2x1024xf32, #tpu.memory_space<vmem>>, vector<1x1x1024xf32>,
    %c0_11 = arith.constant 0 : index
    %c1 = arith.constant 1 : index
    %c0_12 = arith.constant 0 : index
    %18 = vector.load %arg4[%c0_11, %c1, %c0_12] : memref<1x2x1024xf32, #tpu.memory_space<vmem>>, vector<1x1x1024xf32>
    %19 = vector.shape_cast %18 : vector<1x1x1024xf32> to vector<1x1024xf32>
    %20 = vector.shape_cast %14 : vector<1x1024xf32> to vector<1x1x1024xf32>
    tpu.vector_store %arg4[%c0_11, %c1, %c0_12], %20 {strides = array<i32>} : memref<1x2x1024xf32, #tpu.memory_space<vmem>>, vector<1x1x1024xf32>,
    return
  }
  func.func @transform_0(%arg0: i32) -> (i32, i32) {
    %c0_i32 = arith.constant 0 : i32
    %c0_i32_0 = arith.constant 0 : i32
    return %arg0, %c0_i32 : i32, i32
  }
  func.func @transform_1(%arg0: i32) -> (i32, i32) {
    %c0_i32 = arith.constant 0 : i32
    %c0_i32_0 = arith.constant 0 : i32
    %c0_i32_1 = arith.constant 0 : i32
    return %c0_i32, %c0_i32_0 : i32, i32
  }
  func.func @transform_2(%arg0: i32) -> (i32, i32) {
    %c0_i32 = arith.constant 0 : i32
    %c0_i32_0 = arith.constant 0 : i32
    return %arg0, %c0_i32 : i32, i32
  }
  func.func @transform_3(%arg0: i32) -> (i32, i32, i32) {
    %c0_i32 = arith.constant 0 : i32
    %c0_i32_0 = arith.constant 0 : i32
    %c0_i32_1 = arith.constant 0 : i32
    return %arg0, %c0_i32, %c0_i32_0 : i32, i32, i32
  }
}

</mosaic_0001>

<llo_original>
// kernel: tpu_custom_call.1
$region0: #{tpu_custom_call.1}
  #allocation0 [shape = 'u32[]', space=smem, size = 0x4, offset = 0x4, fixed_abs, tag = 'smem constant byte address 0x4 - core index']
  #allocation1 [shape = 'u32[144,128]{1,0:T(1,128)}', space=vmem, size = 0x12000, scoped, tag = 'internal scratch']
  %s0 = inlined_call_operand.hbm [shape: f32[8,768], index: 0, kind: input, shape index: {}]
  %s1 = inlined_call_operand.hbm [shape: bf16[768,1024], index: 1, kind: input, shape index: {}]
  %s2 = inlined_call_operand.hbm [shape: bf16[8,1024], index: 2, kind: output, shape index: {0}]
  %s3 = inlined_call_operand.hbm [shape: f32[1,2,1024], index: 3, kind: output, shape index: {1}]
  %4 = xla_tuple %s2, %s3
  %s5 = sld [smem:[#allocation0]]
  $region34: #{tpu_custom_call.1} parent=0
    _
  %s7 = ssub.s32 1, %s5
  %s8 = scalar_select 0, %s7, %s5
  $region1: #{tpu_custom_call.1} parent=0
    #allocation2 [shape = 'u8[24576]{0}', space=vmem, size = 0x6000, scoped, tag = 'input window, operand 0, single buffered']
    #allocation3 [shape = 's32[1]{0}', space=sflag, size = 0x4, scoped, tag = 'scoped memory for tpu_custom_call.1']
    #allocation4 [shape = 's32[1]{0}', space=sflag, size = 0x4, scoped, tag = 'scoped memory for tpu_custom_call.1']
    #allocation5 [shape = 'u8[1572864]{0}', space=vmem, size = 0x180000, scoped, tag = 'input window, operand 1, single buffered']
    #allocation6 [shape = 's32[1]{0}', space=sflag, size = 0x4, scoped, tag = 'scoped memory for tpu_custom_call.1']
    #allocation7 [shape = 'u8[16384]{0}', space=vmem, size = 0x4000, scoped, tag = 'output window, operand 0, single buffered']
    #allocation8 [shape = 'u8[8192]{0}', space=vmem, size = 0x2000, scoped, tag = 'output window, operand 1, single buffered']
    #allocation9 [shape = 's32[1]{0}', space=sflag, size = 0x4, scoped, tag = 'scoped memory for tpu_custom_call.1']
    %9 = vsyncpa [#allocation3], 0
    %10 = vsyncpa [#allocation6], 0
    %11 = vsyncpa [#allocation4], 0
    %12 = vsyncpa [#allocation9], 0
    // Predicated region
    $region2: #{tpu_custom_call.1} parent=1 // pred_check
      _
    $region3: #{tpu_custom_call.1} parent=1 // pred_check_branch
      %14 = sbr.rel (0) target = $region5
    $region4: #{tpu_custom_call.1} parent=1 // pred_region
      %s16 = ssub.s32 768, 768
      %17 = vsyncadd [#allocation3], %s16
      %s19 = sshll.u32 [#allocation2], 4
      %s20 = int_to_ptr.vmem [resolvable:$true] %s19
      %22 = dma.hbm_to_vmem [thread:$0]  %s0, 768, %s20, [#allocation3]
    $region5: #{tpu_custom_call.1} parent=1 // pred_fallthru
      _
    // Predicated region
    $region6: #{tpu_custom_call.1} parent=1 // pred_check
      _
    $region7: #{tpu_custom_call.1} parent=1 // pred_check_branch
      %24 = sbr.rel (0) target = $region9
    $region8: #{tpu_custom_call.1} parent=1 // pred_region
      %s26 = ssub.s32 49152, 49152
      %27 = vsyncadd [#allocation6], %s26
      %s28 = sshll.u32 [#allocation5], 4
      %s29 = int_to_ptr.vmem [resolvable:$true] %s28
      %34 = dma.hbm_to_vmem [thread:$0]  %s1, 49152, %s29, [#allocation6], 512, 512, 32
    $region9: #{tpu_custom_call.1} parent=1 // pred_fallthru
      _
    // Predicated region
    $region10: #{tpu_custom_call.1} parent=1 // pred_check
      _
    $region11: #{tpu_custom_call.1} parent=1 // pred_check_branch
      %36 = sbr.rel (0) target = $region13
    $region12: #{tpu_custom_call.1} parent=1 // pred_region
      %37 = dma.done [#allocation3], 768
    $region13: #{tpu_custom_call.1} parent=1 // pred_fallthru
      _
    // Predicated region
    $region14: #{tpu_custom_call.1} parent=1 // pred_check
      _
    $region15: #{tpu_custom_call.1} parent=1 // pred_check_branch
      %39 = sbr.rel (0) target = $region17
    $region16: #{tpu_custom_call.1} parent=1 // pred_region
      %40 = dma.done [#allocation6], 49152
    $region17: #{tpu_custom_call.1} parent=1 // pred_fallthru
      _
    %v41 = vld [vmem:[#allocation2] sm:$0xff]
    %v42 = vld [vmem:[#allocation2 + $0x8] sm:$0xff]
    %v43 = vld [vmem:[#allocation2 + $0x10] sm:$0xff]
    %v44 = vld [vmem:[#allocation2 + $0x18] sm:$0xff]
    %v45 = vld [vmem:[#allocation2 + $0x20] sm:$0xff]
    %v46 = vld [vmem:[#allocation2 + $0x28] sm:$0xff]
    %v47 = vpack.c.bf16 %v41, %v41
    %v48 = vpack.c.bf16 %v42, %v42
    %v49 = vpack.c.bf16 %v43, %v43
    %v50 = vpack.c.bf16 %v44, %v44
    %v51 = vpack.c.bf16 %v45, %v45
    %v52 = vpack.c.bf16 %v46, %v46
    %v53 = vld [vmem:[#allocation5] sm:$0xff]
    %v54 = vld [vmem:[#allocation5 + $0x8] sm:$0xff]
    %v55 = vld [vmem:[#allocation5 + $0x10] sm:$0xff]
    %v56 = vld [vmem:[#allocation5 + $0x18] sm:$0xff]
    %v57 = vld [vmem:[#allocation5 + $0x20] sm:$0xff]
    %v58 = vld [vmem:[#allocation5 + $0x28] sm:$0xff]
    %v59 = vld [vmem:[#allocation5 + $0x30] sm:$0xff]
    %v60 = vld [vmem:[#allocation5 + $0x38] sm:$0xff]
    %v61 = vld [vmem:[#allocation5 + $0x40] sm:$0xff]
    %v62 = vld [vmem:[#allocation5 + $0x48] sm:$0xff]
    %v63 = vld [vmem:[#allocation5 + $0x50] sm:$0xff]
    %v64 = vld [vmem:[#allocation5 + $0x58] sm:$0xff]
    %v65 = vld [vmem:[#allocation5 + $0x60] sm:$0xff]
    %v66 = vld [vmem:[#allocation5 + $0x68] sm:$0xff]
    %v67 = vld [vmem:[#allocation5 + $0x70] sm:$0xff]
    %v68 = vld [vmem:[#allocation5 + $0x78] sm:$0xff]
    %v69 = vld [vmem:[#allocation5 + $0x80] sm:$0xff]
    %v70 = vld [vmem:[#allocation5 + $0x88] sm:$0xff]
    %v71 = vld [vmem:[#allocation5 + $0x90] sm:$0xff]
    %v72 = vld [vmem:[#allocation5 + $0x98] sm:$0xff]
    %v73 = vld [vmem:[#allocation5 + $0xa0] sm:$0xff]
    %v74 = vld [vmem:[#allocation5 + $0xa8] sm:$0xff]
    %v75 = vld [vmem:[#allocation5 + $0xb0] sm:$0xff]
    %v76 = vld [vmem:[#allocation5 + $0xb8] sm:$0xff]
    %v77 = vld [vmem:[#allocation5 + $0xc0] sm:$0xff]
    %v78 = vld [vmem:[#allocation5 + $0xc8] sm:$0xff]
    %v79 = vld [vmem:[#allocation5 + $0xd0] sm:$0xff]
    %v80 = vld [vmem:[#allocation5 + $0xd8] sm:$0xff]
    %v81 = vld [vmem:[#allocation5 + $0xe0] sm:$0xff]
    %v82 = vld [vmem:[#allocation5 + $0xe8] sm:$0xff]
    %v83 = vld [vmem:[#allocation5 + $0xf0] sm:$0xff]
    %v84 = vld [vmem:[#allocation5 + $0xf8] sm:$0xff]
    %v85 = vld [vmem:[#allocation5 + $0x100] sm:$0xff]
    %v86 = vld [vmem:[#allocation5 + $0x108] sm:$0xff]
    %v87 = vld [vmem:[#allocation5 + $0x110] sm:$0xff]
    %v88 = vld [vmem:[#allocation5 + $0x118] sm:$0xff]
    %v89 = vld [vmem:[#allocation5 + $0x120] sm:$0xff]
    %v90 = vld [vmem:[#allocation5 + $0x128] sm:$0xff]
    %v91 = vld [vmem:[#allocation5 + $0x130] sm:$0xff]
    %v92 = vld [vmem:[#allocation5 + $0x138] sm:$0xff]
    %v93 = vld [vmem:[#allocation5 + $0x140] sm:$0xff]
    %v94 = vld [vmem:[#allocation5 + $0x148] sm:$0xff]
    %v95 = vld [vmem:[#allocation5 + $0x150] sm:$0xff]
    %v96 = vld [vmem:[#allocation5 + $0x158] sm:$0xff]
    %v97 = vld [vmem:[#allocation5 + $0x160] sm:$0xff]
    %v98 = vld [vmem:[#allocation5 + $0x168] sm:$0xff]
    %v99 = vld [vmem:[#allocation5 + $0x170] sm:$0xff]
    %v100 = vld [vmem:[#allocation5 + $0x178] sm:$0xff]
    %v101 = vld [vmem:[#allocation5 + $0x180] sm:$0xff]
    %v102 = vld [vmem:[#allocation5 + $0x188] sm:$0xff]
    %v103 = vld [vmem:[#allocation5 + $0x190] sm:$0xff]
    %v104 = vld [vmem:[#allocation5 + $0x198] sm:$0xff]
    %v105 = vld [vmem:[#allocation5 + $0x1a0] sm:$0xff]
    %v106 = vld [vmem:[#allocation5 + $0x1a8] sm:$0xff]
    %v107 = vld [vmem:[#allocation5 + $0x1b0] sm:$0xff]
    %v108 = vld [vmem:[#allocation5 + $0x1b8] sm:$0xff]
    %v109 = vld [vmem:[#allocation5 + $0x1c0] sm:$0xff]
    %v110 = vld [vmem:[#allocation5 + $0x1c8] sm:$0xff]
    %v111 = vld [vmem:[#allocation5 + $0x1d0] sm:$0xff]
    %v112 = vld [vmem:[#allocation5 + $0x1d8] sm:$0xff]
    %v113 = vld [vmem:[#allocation5 + $0x1e0] sm:$0xff]
    %v114 = vld [vmem:[#allocation5 + $0x1e8] sm:$0xff]
    %v115 = vld [vmem:[#allocation5 + $0x1f0] sm:$0xff]
    %v116 = vld [vmem:[#allocation5 + $0x1f8] sm:$0xff]
    %v117 = vld [vmem:[#allocation5 + $0x200] sm:$0xff]
    %v118 = vld [vmem:[#allocation5 + $0x208] sm:$0xff]
    %v119 = vld [vmem:[#allocation5 + $0x210] sm:$0xff]
    %v120 = vld [vmem:[#allocation5 + $0x218] sm:$0xff]
    %v121 = vld [vmem:[#allocation5 + $0x220] sm:$0xff]
    %v122 = vld [vmem:[#allocation5 + $0x228] sm:$0xff]
    %v123 = vld [vmem:[#allocation5 + $0x230] sm:$0xff]
    %v124 = vld [vmem:[#allocation5 + $0x238] sm:$0xff]
    %v125 = vld [vmem:[#allocation5 + $0x240] sm:$0xff]
    %v126 = vld [vmem:[#allocation5 + $0x248] sm:$0xff]
    %v127 = vld [vmem:[#allocation5 + $0x250] sm:$0xff]
    %v128 = vld [vmem:[#allocation5 + $0x258] sm:$0xff]
    %v129 = vld [vmem:[#allocation5 + $0x260] sm:$0xff]
    %v130 = vld [vmem:[#allocation5 + $0x268] sm:$0xff]
    %v131 = vld [vmem:[#allocation5 + $0x270] sm:$0xff]
    %v132 = vld [vmem:[#allocation5 + $0x278] sm:$0xff]
    %v133 = vld [vmem:[#allocation5 + $0x280] sm:$0xff]
    %v134 = vld [vmem:[#allocation5 + $0x288] sm:$0xff]
    %v135 = vld [vmem:[#allocation5 + $0x290] sm:$0xff]
    %v136 = vld [vmem:[#allocation5 + $0x298] sm:$0xff]
    %v137 = vld [vmem:[#allocation5 + $0x2a0] sm:$0xff]
    %v138 = vld [vmem:[#allocation5 + $0x2a8] sm:$0xff]
    %v139 = vld [vmem:[#allocation5 + $0x2b0] sm:$0xff]
    %v140 = vld [vmem:[#allocation5 + $0x2b8] sm:$0xff]
    %v141 = vld [vmem:[#allocation5 + $0x2c0] sm:$0xff]
    %v142 = vld [vmem:[#allocation5 + $0x2c8] sm:$0xff]
    %v143 = vld [vmem:[#allocation5 + $0x2d0] sm:$0xff]
    %v144 = vld [vmem:[#allocation5 + $0x2d8] sm:$0xff]
    %v145 = vld [vmem:[#allocation5 + $0x2e0] sm:$0xff]
    %v146 = vld [vmem:[#allocation5 + $0x2e8] sm:$0xff]
    %v147 = vld [vmem:[#allocation5 + $0x2f0] sm:$0xff]
    %v148 = vld [vmem:[#allocation5 + $0x2f8] sm:$0xff]
    %v149 = vld [vmem:[#allocation5 + $0x300] sm:$0xff]
    %v150 = vld [vmem:[#allocation5 + $0x308] sm:$0xff]
    %v151 = vld [vmem:[#allocation5 + $0x310] sm:$0xff]
    %v152 = vld [vmem:[#allocation5 + $0x318] sm:$0xff]
    %v153 = vld [vmem:[#allocation5 + $0x320] sm:$0xff]
    %v154 = vld [vmem:[#allocation5 + $0x328] sm:$0xff]
    %v155 = vld [vmem:[#allocation5 + $0x330] sm:$0xff]
    %v156 = vld [vmem:[#allocation5 + $0x338] sm:$0xff]
    %v157 = vld [vmem:[#allocation5 + $0x340] sm:$0xff]
    %v158 = vld [vmem:[#allocation5 + $0x348] sm:$0xff]
    %v159 = vld [vmem:[#allocation5 + $0x350] sm:$0xff]
    %v160 = vld [vmem:[#allocation5 + $0x358] sm:$0xff]
    %v161 = vld [vmem:[#allocation5 + $0x360] sm:$0xff]
    %v162 = vld [vmem:[#allocation5 + $0x368] sm:$0xff]
    %v163 = vld [vmem:[#allocation5 + $0x370] sm:$0xff]
    %v164 = vld [vmem:[#allocation5 + $0x378] sm:$0xff]
    %v165 = vld [vmem:[#allocation5 + $0x380] sm:$0xff]
    %v166 = vld [vmem:[#allocation5 + $0x388] sm:$0xff]
    %v167 = vld [vmem:[#allocation5 + $0x390] sm:$0xff]
    %v168 = vld [vmem:[#allocation5 + $0x398] sm:$0xff]
    %v169 = vld [vmem:[#allocation5 + $0x3a0] sm:$0xff]
    %v170 = vld [vmem:[#allocation5 + $0x3a8] sm:$0xff]
    %v171 = vld [vmem:[#allocation5 + $0x3b0] sm:$0xff]
    %v172 = vld [vmem:[#allocation5 + $0x3b8] sm:$0xff]
    %v173 = vld [vmem:[#allocation5 + $0x3c0] sm:$0xff]
    %v174 = vld [vmem:[#allocation5 + $0x3c8] sm:$0xff]
    %v175 = vld [vmem:[#allocation5 + $0x3d0] sm:$0xff]
    %v176 = vld [vmem:[#allocation5 + $0x3d8] sm:$0xff]
    %v177 = vld [vmem:[#allocation5 + $0x3e0] sm:$0xff]
    %v178 = vld [vmem:[#allocation5 + $0x3e8] sm:$0xff]
    %v179 = vld [vmem:[#allocation5 + $0x3f0] sm:$0xff]
    %v180 = vld [vmem:[#allocation5 + $0x3f8] sm:$0xff]
    %v181 = vld [vmem:[#allocation5 + $0x400] sm:$0xff]
    %v182 = vld [vmem:[#allocation5 + $0x408] sm:$0xff]
    %v183 = vld [vmem:[#allocation5 + $0x410] sm:$0xff]
    %v184 = vld [vmem:[#allocation5 + $0x418] sm:$0xff]
    %v185 = vld [vmem:[#allocation5 + $0x420] sm:$0xff]
    %v186 = vld [vmem:[#allocation5 + $0x428] sm:$0xff]
    %v187 = vld [vmem:[#allocation5 + $0x430] sm:$0xff]
    %v188 = vld [vmem:[#allocation5 + $0x438] sm:$0xff]
    %v189 = vld [vmem:[#allocation5 + $0x440] sm:$0xff]
    %v190 = vld [vmem:[#allocation5 + $0x448] sm:$0xff]
    %v191 = vld [vmem:[#allocation5 + $0x450] sm:$0xff]
    %v192 = vld [vmem:[#allocation5 + $0x458] sm:$0xff]
    %v193 = vld [vmem:[#allocation5 + $0x460] sm:$0xff]
    %v194 = vld [vmem:[#allocation5 + $0x468] sm:$0xff]
    %v195 = vld [vmem:[#allocation5 + $0x470] sm:$0xff]
    %v196 = vld [vmem:[#allocation5 + $0x478] sm:$0xff]
    %v197 = vld [vmem:[#allocation5 + $0x480] sm:$0xff]
    %v198 = vld [vmem:[#allocation5 + $0x488] sm:$0xff]
    %v199 = vld [vmem:[#allocation5 + $0x490] sm:$0xff]
    %v200 = vld [vmem:[#allocation5 + $0x498] sm:$0xff]
    %v201 = vld [vmem:[#allocation5 + $0x4a0] sm:$0xff]
    %v202 = vld [vmem:[#allocation5 + $0x4a8] sm:$0xff]
    %v203 = vld [vmem:[#allocation5 + $0x4b0] sm:$0xff]
    %v204 = vld [vmem:[#allocation5 + $0x4b8] sm:$0xff]
    %v205 = vld [vmem:[#allocation5 + $0x4c0] sm:$0xff]
    %v206 = vld [vmem:[#allocation5 + $0x4c8] sm:$0xff]
    %v207 = vld [vmem:[#allocation5 + $0x4d0] sm:$0xff]
    %v208 = vld [vmem:[#allocation5 + $0x4d8] sm:$0xff]
    %v209 = vld [vmem:[#allocation5 + $0x4e0] sm:$0xff]
    %v210 = vld [vmem:[#allocation5 + $0x4e8] sm:$0xff]
    %v211 = vld [vmem:[#allocation5 + $0x4f0] sm:$0xff]
    %v212 = vld [vmem:[#allocation5 + $0x4f8] sm:$0xff]
    %v213 = vld [vmem:[#allocation5 + $0x500] sm:$0xff]
    %v214 = vld [vmem:[#allocation5 + $0x508] sm:$0xff]
    %v215 = vld [vmem:[#allocation5 + $0x510] sm:$0xff]
    %v216 = vld [vmem:[#allocation5 + $0x518] sm:$0xff]
    %v217 = vld [vmem:[#allocation5 + $0x520] sm:$0xff]
    %v218 = vld [vmem:[#allocation5 + $0x528] sm:$0xff]
    %v219 = vld [vmem:[#allocation5 + $0x530] sm:$0xff]
    %v220 = vld [vmem:[#allocation5 + $0x538] sm:$0xff]
    %v221 = vld [vmem:[#allocation5 + $0x540] sm:$0xff]
    %v222 = vld [vmem:[#allocation5 + $0x548] sm:$0xff]
    %v223 = vld [vmem:[#allocation5 + $0x550] sm:$0xff]
    %v224 = vld [vmem:[#allocation5 + $0x558] sm:$0xff]
    %v225 = vld [vmem:[#allocation5 + $0x560] sm:$0xff]
    %v226 = vld [vmem:[#allocation5 + $0x568] sm:$0xff]
    %v227 = vld [vmem:[#allocation5 + $0x570] sm:$0xff]
    %v228 = vld [vmem:[#allocation5 + $0x578] sm:$0xff]
    %v229 = vld [vmem:[#allocation5 + $0x580] sm:$0xff]
    %v230 = vld [vmem:[#allocation5 + $0x588] sm:$0xff]
    %v231 = vld [vmem:[#allocation5 + $0x590] sm:$0xff]
    %v232 = vld [vmem:[#allocation5 + $0x598] sm:$0xff]
    %v233 = vld [vmem:[#allocation5 + $0x5a0] sm:$0xff]
    %v234 = vld [vmem:[#allocation5 + $0x5a8] sm:$0xff]
    %v235 = vld [vmem:[#allocation5 + $0x5b0] sm:$0xff]
    %v236 = vld [vmem:[#allocation5 + $0x5b8] sm:$0xff]
    %v237 = vld [vmem:[#allocation5 + $0x5c0] sm:$0xff]
    %v238 = vld [vmem:[#allocation5 + $0x5c8] sm:$0xff]
    %v239 = vld [vmem:[#allocation5 + $0x5d0] sm:$0xff]
    %v240 = vld [vmem:[#allocation5 + $0x5d8] sm:$0xff]
    %v241 = vld [vmem:[#allocation5 + $0x5e0] sm:$0xff]
    %v242 = vld [vmem:[#allocation5 + $0x5e8] sm:$0xff]
    %v243 = vld [vmem:[#allocation5 + $0x5f0] sm:$0xff]
    %v244 = vld [vmem:[#allocation5 + $0x5f8] sm:$0xff]
    %v245 = vld [vmem:[#allocation5 + $0x600] sm:$0xff]
    %v246 = vld [vmem:[#allocation5 + $0x608] sm:$0xff]
    %v247 = vld [vmem:[#allocation5 + $0x610] sm:$0xff]
    %v248 = vld [vmem:[#allocation5 + $0x618] sm:$0xff]
    %v249 = vld [vmem:[#allocation5 + $0x620] sm:$0xff]
    %v250 = vld [vmem:[#allocation5 + $0x628] sm:$0xff]
    %v251 = vld [vmem:[#allocation5 + $0x630] sm:$0xff]
    %v252 = vld [vmem:[#allocation5 + $0x638] sm:$0xff]
    %v253 = vld [vmem:[#allocation5 + $0x640] sm:$0xff]
    %v254 = vld [vmem:[#allocation5 + $0x648] sm:$0xff]
    %v255 = vld [vmem:[#allocation5 + $0x650] sm:$0xff]
    %v256 = vld [vmem:[#allocation5 + $0x658] sm:$0xff]
    %v257 = vld [vmem:[#allocation5 + $0x660] sm:$0xff]
    %v258 = vld [vmem:[#allocation5 + $0x668] sm:$0xff]
    %v259 = vld [vmem:[#allocation5 + $0x670] sm:$0xff]
    %v260 = vld [vmem:[#allocation5 + $0x678] sm:$0xff]
    %v261 = vld [vmem:[#allocation5 + $0x680] sm:$0xff]
    %v262 = vld [vmem:[#allocation5 + $0x688] sm:$0xff]
    %v263 = vld [vmem:[#allocation5 + $0x690] sm:$0xff]
    %v264 = vld [vmem:[#allocation5 + $0x698] sm:$0xff]
    %v265 = vld [vmem:[#allocation5 + $0x6a0] sm:$0xff]
    %v266 = vld [vmem:[#allocation5 + $0x6a8] sm:$0xff]
    %v267 = vld [vmem:[#allocation5 + $0x6b0] sm:$0xff]
    %v268 = vld [vmem:[#allocation5 + $0x6b8] sm:$0xff]
    %v269 = vld [vmem:[#allocation5 + $0x6c0] sm:$0xff]
    %v270 = vld [vmem:[#allocation5 + $0x6c8] sm:$0xff]
    %v271 = vld [vmem:[#allocation5 + $0x6d0] sm:$0xff]
    %v272 = vld [vmem:[#allocation5 + $0x6d8] sm:$0xff]
    %v273 = vld [vmem:[#allocation5 + $0x6e0] sm:$0xff]
    %v274 = vld [vmem:[#allocation5 + $0x6e8] sm:$0xff]
    %v275 = vld [vmem:[#allocation5 + $0x6f0] sm:$0xff]
    %v276 = vld [vmem:[#allocation5 + $0x6f8] sm:$0xff]
    %v277 = vld [vmem:[#allocation5 + $0x700] sm:$0xff]
    %v278 = vld [vmem:[#allocation5 + $0x708] sm:$0xff]
    %v279 = vld [vmem:[#allocation5 + $0x710] sm:$0xff]
    %v280 = vld [vmem:[#allocation5 + $0x718] sm:$0xff]
    %v281 = vld [vmem:[#allocation5 + $0x720] sm:$0xff]
    %v282 = vld [vmem:[#allocation5 + $0x728] sm:$0xff]
    %v283 = vld [vmem:[#allocation5 + $0x730] sm:$0xff]
    %v284 = vld [vmem:[#allocation5 + $0x738] sm:$0xff]
    %v285 = vld [vmem:[#allocation5 + $0x740] sm:$0xff]
    %v286 = vld [vmem:[#allocation5 + $0x748] sm:$0xff]
    %v287 = vld [vmem:[#allocation5 + $0x750] sm:$0xff]
    %v288 = vld [vmem:[#allocation5 + $0x758] sm:$0xff]
    %v289 = vld [vmem:[#allocation5 + $0x760] sm:$0xff]
    %v290 = vld [vmem:[#allocation5 + $0x768] sm:$0xff]
    %v291 = vld [vmem:[#allocation5 + $0x770] sm:$0xff]
    %v292 = vld [vmem:[#allocation5 + $0x778] sm:$0xff]
    %v293 = vld [vmem:[#allocation5 + $0x780] sm:$0xff]
    %v294 = vld [vmem:[#allocation5 + $0x788] sm:$0xff]
    %v295 = vld [vmem:[#allocation5 + $0x790] sm:$0xff]
    %v296 = vld [vmem:[#allocation5 + $0x798] sm:$0xff]
    %v297 = vld [vmem:[#allocation5 + $0x7a0] sm:$0xff]
    %v298 = vld [vmem:[#allocation5 + $0x7a8] sm:$0xff]
    %v299 = vld [vmem:[#allocation5 + $0x7b0] sm:$0xff]
    %v300 = vld [vmem:[#allocation5 + $0x7b8] sm:$0xff]
    %v301 = vld [vmem:[#allocation5 + $0x7c0] sm:$0xff]
    %v302 = vld [vmem:[#allocation5 + $0x7c8] sm:$0xff]
    %v303 = vld [vmem:[#allocation5 + $0x7d0] sm:$0xff]
    %v304 = vld [vmem:[#allocation5 + $0x7d8] sm:$0xff]
    %v305 = vld [vmem:[#allocation5 + $0x7e0] sm:$0xff]
    %v306 = vld [vmem:[#allocation5 + $0x7e8] sm:$0xff]
    %v307 = vld [vmem:[#allocation5 + $0x7f0] sm:$0xff]
    %v308 = vld [vmem:[#allocation5 + $0x7f8] sm:$0xff]
    %v309 = vld [vmem:[#allocation5 + $0x800] sm:$0xff]
    %v310 = vld [vmem:[#allocation5 + $0x808] sm:$0xff]
    %v311 = vld [vmem:[#allocation5 + $0x810] sm:$0xff]
    %v312 = vld [vmem:[#allocation5 + $0x818] sm:$0xff]
    %v313 = vld [vmem:[#allocation5 + $0x820] sm:$0xff]
    %v314 = vld [vmem:[#allocation5 + $0x828] sm:$0xff]
    %v315 = vld [vmem:[#allocation5 + $0x830] sm:$0xff]
    %v316 = vld [vmem:[#allocation5 + $0x838] sm:$0xff]
    %v317 = vld [vmem:[#allocation5 + $0x840] sm:$0xff]
    %v318 = vld [vmem:[#allocation5 + $0x848] sm:$0xff]
    %v319 = vld [vmem:[#allocation5 + $0x850] sm:$0xff]
    %v320 = vld [vmem:[#allocation5 + $0x858] sm:$0xff]
    %v321 = vld [vmem:[#allocation5 + $0x860] sm:$0xff]
    %v322 = vld [vmem:[#allocation5 + $0x868] sm:$0xff]
    %v323 = vld [vmem:[#allocation5 + $0x870] sm:$0xff]
    %v324 = vld [vmem:[#allocation5 + $0x878] sm:$0xff]
    %v325 = vld [vmem:[#allocation5 + $0x880] sm:$0xff]
    %v326 = vld [vmem:[#allocation5 + $0x888] sm:$0xff]
    %v327 = vld [vmem:[#allocation5 + $0x890] sm:$0xff]
    %v328 = vld [vmem:[#allocation5 + $0x898] sm:$0xff]
    %v329 = vld [vmem:[#allocation5 + $0x8a0] sm:$0xff]
    %v330 = vld [vmem:[#allocation5 + $0x8a8] sm:$0xff]
    %v331 = vld [vmem:[#allocation5 + $0x8b0] sm:$0xff]
    %v332 = vld [vmem:[#allocation5 + $0x8b8] sm:$0xff]
    %v333 = vld [vmem:[#allocation5 + $0x8c0] sm:$0xff]
    %v334 = vld [vmem:[#allocation5 + $0x8c8] sm:$0xff]
    %v335 = vld [vmem:[#allocation5 + $0x8d0] sm:$0xff]
    %v336 = vld [vmem:[#allocation5 + $0x8d8] sm:$0xff]
    %v337 = vld [vmem:[#allocation5 + $0x8e0] sm:$0xff]
    %v338 = vld [vmem:[#allocation5 + $0x8e8] sm:$0xff]
    %v339 = vld [vmem:[#allocation5 + $0x8f0] sm:$0xff]
    %v340 = vld [vmem:[#allocation5 + $0x8f8] sm:$0xff]
    %v341 = vld [vmem:[#allocation5 + $0x900] sm:$0xff]
    %v342 = vld [vmem:[#allocation5 + $0x908] sm:$0xff]
    %v343 = vld [vmem:[#allocation5 + $0x910] sm:$0xff]
    %v344 = vld [vmem:[#allocation5 + $0x918] sm:$0xff]
    %v345 = vld [vmem:[#allocation5 + $0x920] sm:$0xff]
    %v346 = vld [vmem:[#allocation5 + $0x928] sm:$0xff]
    %v347 = vld [vmem:[#allocation5 + $0x930] sm:$0xff]
    %v348 = vld [vmem:[#allocation5 + $0x938] sm:$0xff]
    %v349 = vld [vmem:[#allocation5 + $0x940] sm:$0xff]
    %v350 = vld [vmem:[#allocation5 + $0x948] sm:$0xff]
    %v351 = vld [vmem:[#allocation5 + $0x950] sm:$0xff]
    %v352 = vld [vmem:[#allocation5 + $0x958] sm:$0xff]
    %v353 = vld [vmem:[#allocation5 + $0x960] sm:$0xff]
    %v354 = vld [vmem:[#allocation5 + $0x968] sm:$0xff]
    %v355 = vld [vmem:[#allocation5 + $0x970] sm:$0xff]
    %v356 = vld [vmem:[#allocation5 + $0x978] sm:$0xff]
    %v357 = vld [vmem:[#allocation5 + $0x980] sm:$0xff]
    %v358 = vld [vmem:[#allocation5 + $0x988] sm:$0xff]
    %v359 = vld [vmem:[#allocation5 + $0x990] sm:$0xff]
    %v360 = vld [vmem:[#allocation5 + $0x998] sm:$0xff]
    %v361 = vld [vmem:[#allocation5 + $0x9a0] sm:$0xff]
    %v362 = vld [vmem:[#allocation5 + $0x9a8] sm:$0xff]
    %v363 = vld [vmem:[#allocation5 + $0x9b0] sm:$0xff]
    %v364 = vld [vmem:[#allocation5 + $0x9b8] sm:$0xff]
    %v365 = vld [vmem:[#allocation5 + $0x9c0] sm:$0xff]
    %v366 = vld [vmem:[#allocation5 + $0x9c8] sm:$0xff]
    %v367 = vld [vmem:[#allocation5 + $0x9d0] sm:$0xff]
    %v368 = vld [vmem:[#allocation5 + $0x9d8] sm:$0xff]
    %v369 = vld [vmem:[#allocation5 + $0x9e0] sm:$0xff]
    %v370 = vld [vmem:[#allocation5 + $0x9e8] sm:$0xff]
    %v371 = vld [vmem:[#allocation5 + $0x9f0] sm:$0xff]
    %v372 = vld [vmem:[#allocation5 + $0x9f8] sm:$0xff]
    %v373 = vld [vmem:[#allocation5 + $0xa00] sm:$0xff]
    %v374 = vld [vmem:[#allocation5 + $0xa08] sm:$0xff]
    %v375 = vld [vmem:[#allocation5 + $0xa10] sm:$0xff]
    %v376 = vld [vmem:[#allocation5 + $0xa18] sm:$0xff]
    %v377 = vld [vmem:[#allocation5 + $0xa20] sm:$0xff]
    %v378 = vld [vmem:[#allocation5 + $0xa28] sm:$0xff]
    %v379 = vld [vmem:[#allocation5 + $0xa30] sm:$0xff]
    %v380 = vld [vmem:[#allocation5 + $0xa38] sm:$0xff]
    %v381 = vld [vmem:[#allocation5 + $0xa40] sm:$0xff]
    %v382 = vld [vmem:[#allocation5 + $0xa48] sm:$0xff]
    %v383 = vld [vmem:[#allocation5 + $0xa50] sm:$0xff]
    %v384 = vld [vmem:[#allocation5 + $0xa58] sm:$0xff]
    %v385 = vld [vmem:[#allocation5 + $0xa60] sm:$0xff]
    %v386 = vld [vmem:[#allocation5 + $0xa68] sm:$0xff]
    %v387 = vld [vmem:[#allocation5 + $0xa70] sm:$0xff]
    %v388 = vld [vmem:[#allocation5 + $0xa78] sm:$0xff]
    %v389 = vld [vmem:[#allocation5 + $0xa80] sm:$0xff]
    %v390 = vld [vmem:[#allocation5 + $0xa88] sm:$0xff]
    %v391 = vld [vmem:[#allocation5 + $0xa90] sm:$0xff]
    %v392 = vld [vmem:[#allocation5 + $0xa98] sm:$0xff]
    %v393 = vld [vmem:[#allocation5 + $0xaa0] sm:$0xff]
    %v394 = vld [vmem:[#allocation5 + $0xaa8] sm:$0xff]
    %v395 = vld [vmem:[#allocation5 + $0xab0] sm:$0xff]
    %v396 = vld [vmem:[#allocation5 + $0xab8] sm:$0xff]
    %v397 = vld [vmem:[#allocation5 + $0xac0] sm:$0xff]
    %v398 = vld [vmem:[#allocation5 + $0xac8] sm:$0xff]
    %v399 = vld [vmem:[#allocation5 + $0xad0] sm:$0xff]
    %v400 = vld [vmem:[#allocation5 + $0xad8] sm:$0xff]
    %v401 = vld [vmem:[#allocation5 + $0xae0] sm:$0xff]
    %v402 = vld [vmem:[#allocation5 + $0xae8] sm:$0xff]
    %v403 = vld [vmem:[#allocation5 + $0xaf0] sm:$0xff]
    %v404 = vld [vmem:[#allocation5 + $0xaf8] sm:$0xff]
    %v405 = vld [vmem:[#allocation5 + $0xb00] sm:$0xff]
    %v406 = vld [vmem:[#allocation5 + $0xb08] sm:$0xff]
    %v407 = vld [vmem:[#allocation5 + $0xb10] sm:$0xff]
    %v408 = vld [vmem:[#allocation5 + $0xb18] sm:$0xff]
    %v409 = vld [vmem:[#allocation5 + $0xb20] sm:$0xff]
    %v410 = vld [vmem:[#allocation5 + $0xb28] sm:$0xff]
    %v411 = vld [vmem:[#allocation5 + $0xb30] sm:$0xff]
    %v412 = vld [vmem:[#allocation5 + $0xb38] sm:$0xff]
    %v413 = vld [vmem:[#allocation5 + $0xb40] sm:$0xff]
    %v414 = vld [vmem:[#allocation5 + $0xb48] sm:$0xff]
    %v415 = vld [vmem:[#allocation5 + $0xb50] sm:$0xff]
    %v416 = vld [vmem:[#allocation5 + $0xb58] sm:$0xff]
    %v417 = vld [vmem:[#allocation5 + $0xb60] sm:$0xff]
    %v418 = vld [vmem:[#allocation5 + $0xb68] sm:$0xff]
    %v419 = vld [vmem:[#allocation5 + $0xb70] sm:$0xff]
    %v420 = vld [vmem:[#allocation5 + $0xb78] sm:$0xff]
    %v421 = vld [vmem:[#allocation5 + $0xb80] sm:$0xff]
    %v422 = vld [vmem:[#allocation5 + $0xb88] sm:$0xff]
    %v423 = vld [vmem:[#allocation5 + $0xb90] sm:$0xff]
    %v424 = vld [vmem:[#allocation5 + $0xb98] sm:$0xff]
    %v425 = vld [vmem:[#allocation5 + $0xba0] sm:$0xff]
    %v426 = vld [vmem:[#allocation5 + $0xba8] sm:$0xff]
    %v427 = vld [vmem:[#allocation5 + $0xbb0] sm:$0xff]
    %v428 = vld [vmem:[#allocation5 + $0xbb8] sm:$0xff]
    %v429 = vld [vmem:[#allocation5 + $0xbc0] sm:$0xff]
    %v430 = vld [vmem:[#allocation5 + $0xbc8] sm:$0xff]
    %v431 = vld [vmem:[#allocation5 + $0xbd0] sm:$0xff]
    %v432 = vld [vmem:[#allocation5 + $0xbd8] sm:$0xff]
    %v433 = vld [vmem:[#allocation5 + $0xbe0] sm:$0xff]
    %v434 = vld [vmem:[#allocation5 + $0xbe8] sm:$0xff]
    %v435 = vld [vmem:[#allocation5 + $0xbf0] sm:$0xff]
    %v436 = vld [vmem:[#allocation5 + $0xbf8] sm:$0xff]
    %v821 = vunpack.c.l.b16 %v53
    %v822 = vunpack.c.h.b16 %v53
    %v823 = vunpack.c.l.b16 %v54
    %v824 = vunpack.c.h.b16 %v54
    %v825 = vunpack.c.l.b16 %v55
    %v826 = vunpack.c.h.b16 %v55
    %v827 = vunpack.c.l.b16 %v56
    %v828 = vunpack.c.h.b16 %v56
    %v829 = vunpack.c.l.b16 %v57
    %v830 = vunpack.c.h.b16 %v57
    %v831 = vunpack.c.l.b16 %v58
    %v832 = vunpack.c.h.b16 %v58
    %v833 = vunpack.c.l.b16 %v59
    %v834 = vunpack.c.h.b16 %v59
    %v835 = vunpack.c.l.b16 %v60
    %v836 = vunpack.c.h.b16 %v60
    %v837 = vunpack.c.l.b16 %v61
    %v838 = vunpack.c.h.b16 %v61
    %v839 = vunpack.c.l.b16 %v62
    %v840 = vunpack.c.h.b16 %v62
    %v841 = vunpack.c.l.b16 %v63
    %v842 = vunpack.c.h.b16 %v63
    %v843 = vunpack.c.l.b16 %v64
    %v844 = vunpack.c.h.b16 %v64
    %v845 = vunpack.c.l.b16 %v65
    %v846 = vunpack.c.h.b16 %v65
    %v847 = vunpack.c.l.b16 %v66
    %v848 = vunpack.c.h.b16 %v66
    %v849 = vunpack.c.l.b16 %v67
    %v850 = vunpack.c.h.b16 %v67
    %v851 = vunpack.c.l.b16 %v68
    %v852 = vunpack.c.h.b16 %v68
    %v853 = vunpack.c.l.b16 %v69
    %v854 = vunpack.c.h.b16 %v69
    %v855 = vunpack.c.l.b16 %v70
    %v856 = vunpack.c.h.b16 %v70
    %v857 = vunpack.c.l.b16 %v71
    %v858 = vunpack.c.h.b16 %v71
    %v859 = vunpack.c.l.b16 %v72
    %v860 = vunpack.c.h.b16 %v72
    %v861 = vunpack.c.l.b16 %v73
    %v862 = vunpack.c.h.b16 %v73
    %v863 = vunpack.c.l.b16 %v74
    %v864 = vunpack.c.h.b16 %v74
    %v865 = vunpack.c.l.b16 %v75
    %v866 = vunpack.c.h.b16 %v75
    %v867 = vunpack.c.l.b16 %v76
    %v868 = vunpack.c.h.b16 %v76
    %v869 = vunpack.c.l.b16 %v77
    %v870 = vunpack.c.h.b16 %v77
    %v871 = vunpack.c.l.b16 %v78
    %v872 = vunpack.c.h.b16 %v78
    %v873 = vunpack.c.l.b16 %v79
    %v874 = vunpack.c.h.b16 %v79
    %v875 = vunpack.c.l.b16 %v80
    %v876 = vunpack.c.h.b16 %v80
    %v877 = vunpack.c.l.b16 %v81
    %v878 = vunpack.c.h.b16 %v81
    %v879 = vunpack.c.l.b16 %v82
    %v880 = vunpack.c.h.b16 %v82
    %v881 = vunpack.c.l.b16 %v83
    %v882 = vunpack.c.h.b16 %v83
    %v883 = vunpack.c.l.b16 %v84
    %v884 = vunpack.c.h.b16 %v84
    %v885 = vunpack.c.l.b16 %v85
    %v886 = vunpack.c.h.b16 %v85
    %v887 = vunpack.c.l.b16 %v86
    %v888 = vunpack.c.h.b16 %v86
    %v889 = vunpack.c.l.b16 %v87
    %v890 = vunpack.c.h.b16 %v87
    %v891 = vunpack.c.l.b16 %v88
    %v892 = vunpack.c.h.b16 %v88
    %v893 = vunpack.c.l.b16 %v89
    %v894 = vunpack.c.h.b16 %v89
    %v895 = vunpack.c.l.b16 %v90
    %v896 = vunpack.c.h.b16 %v90
    %v897 = vunpack.c.l.b16 %v91
    %v898 = vunpack.c.h.b16 %v91
    %v899 = vunpack.c.l.b16 %v92
    %v900 = vunpack.c.h.b16 %v92
    %v901 = vunpack.c.l.b16 %v93
    %v902 = vunpack.c.h.b16 %v93
    %v903 = vunpack.c.l.b16 %v94
    %v904 = vunpack.c.h.b16 %v94
    %v905 = vunpack.c.l.b16 %v95
    %v906 = vunpack.c.h.b16 %v95
    %v907 = vunpack.c.l.b16 %v96
    %v908 = vunpack.c.h.b16 %v96
    %v909 = vunpack.c.l.b16 %v97
    %v910 = vunpack.c.h.b16 %v97
    %v911 = vunpack.c.l.b16 %v98
    %v912 = vunpack.c.h.b16 %v98
    %v913 = vunpack.c.l.b16 %v99
    %v914 = vunpack.c.h.b16 %v99
    %v915 = vunpack.c.l.b16 %v100
    %v916 = vunpack.c.h.b16 %v100
    %v917 = vunpack.c.l.b16 %v101
    %v918 = vunpack.c.h.b16 %v101
    %v919 = vunpack.c.l.b16 %v102
    %v920 = vunpack.c.h.b16 %v102
    %v921 = vunpack.c.l.b16 %v103
    %v922 = vunpack.c.h.b16 %v103
    %v923 = vunpack.c.l.b16 %v104
    %v924 = vunpack.c.h.b16 %v104
    %v925 = vunpack.c.l.b16 %v105
    %v926 = vunpack.c.h.b16 %v105
    %v927 = vunpack.c.l.b16 %v106
    %v928 = vunpack.c.h.b16 %v106
    %v929 = vunpack.c.l.b16 %v107
    %v930 = vunpack.c.h.b16 %v107
    %v931 = vunpack.c.l.b16 %v108
    %v932 = vunpack.c.h.b16 %v108
    %v933 = vunpack.c.l.b16 %v109
    %v934 = vunpack.c.h.b16 %v109
    %v935 = vunpack.c.l.b16 %v110
    %v936 = vunpack.c.h.b16 %v110
    %v937 = vunpack.c.l.b16 %v111
    %v938 = vunpack.c.h.b16 %v111
    %v939 = vunpack.c.l.b16 %v112
    %v940 = vunpack.c.h.b16 %v112
    %v941 = vunpack.c.l.b16 %v113
    %v942 = vunpack.c.h.b16 %v113
    %v943 = vunpack.c.l.b16 %v114
    %v944 = vunpack.c.h.b16 %v114
    %v945 = vunpack.c.l.b16 %v115
    %v946 = vunpack.c.h.b16 %v115
    %v947 = vunpack.c.l.b16 %v116
    %v948 = vunpack.c.h.b16 %v116
    %v949 = vunpack.c.l.b16 %v117
    %v950 = vunpack.c.h.b16 %v117
    %v951 = vunpack.c.l.b16 %v118
    %v952 = vunpack.c.h.b16 %v118
    %v953 = vunpack.c.l.b16 %v119
    %v954 = vunpack.c.h.b16 %v119
    %v955 = vunpack.c.l.b16 %v120
    %v956 = vunpack.c.h.b16 %v120
    %v957 = vunpack.c.l.b16 %v121
    %v958 = vunpack.c.h.b16 %v121
    %v959 = vunpack.c.l.b16 %v122
    %v960 = vunpack.c.h.b16 %v122
    %v961 = vunpack.c.l.b16 %v123
    %v962 = vunpack.c.h.b16 %v123
    %v963 = vunpack.c.l.b16 %v124
    %v964 = vunpack.c.h.b16 %v124
    %v965 = vunpack.c.l.b16 %v125
    %v966 = vunpack.c.h.b16 %v125
    %v967 = vunpack.c.l.b16 %v126
    %v968 = vunpack.c.h.b16 %v126
    %v969 = vunpack.c.l.b16 %v127
    %v970 = vunpack.c.h.b16 %v127
    %v971 = vunpack.c.l.b16 %v128
    %v972 = vunpack.c.h.b16 %v128
    %v973 = vunpack.c.l.b16 %v129
    %v974 = vunpack.c.h.b16 %v129
    %v975 = vunpack.c.l.b16 %v130
    %v976 = vunpack.c.h.b16 %v130
    %v977 = vunpack.c.l.b16 %v131
    %v978 = vunpack.c.h.b16 %v131
    %v979 = vunpack.c.l.b16 %v132
    %v980 = vunpack.c.h.b16 %v132
    %v981 = vunpack.c.l.b16 %v133
    %v982 = vunpack.c.h.b16 %v133
    %v983 = vunpack.c.l.b16 %v134
    %v984 = vunpack.c.h.b16 %v134
    %v985 = vunpack.c.l.b16 %v135
    %v986 = vunpack.c.h.b16 %v135
    %v987 = vunpack.c.l.b16 %v136
    %v988 = vunpack.c.h.b16 %v136
    %v989 = vunpack.c.l.b16 %v137
    %v990 = vunpack.c.h.b16 %v137
    %v991 = vunpack.c.l.b16 %v138
    %v992 = vunpack.c.h.b16 %v138
    %v993 = vunpack.c.l.b16 %v139
    %v994 = vunpack.c.h.b16 %v139
    %v995 = vunpack.c.l.b16 %v140
    %v996 = vunpack.c.h.b16 %v140
    %v997 = vunpack.c.l.b16 %v141
    %v998 = vunpack.c.h.b16 %v141
    %v999 = vunpack.c.l.b16 %v142
    %v1000 = vunpack.c.h.b16 %v142
    %v1001 = vunpack.c.l.b16 %v143
    %v1002 = vunpack.c.h.b16 %v143
    %v1003 = vunpack.c.l.b16 %v144
    %v1004 = vunpack.c.h.b16 %v144
    %v1005 = vunpack.c.l.b16 %v145
    %v1006 = vunpack.c.h.b16 %v145
    %v1007 = vunpack.c.l.b16 %v146
    %v1008 = vunpack.c.h.b16 %v146
    %v1009 = vunpack.c.l.b16 %v147
    %v1010 = vunpack.c.h.b16 %v147
    %v1011 = vunpack.c.l.b16 %v148
    %v1012 = vunpack.c.h.b16 %v148
    %v1013 = vunpack.c.l.b16 %v149
    %v1014 = vunpack.c.h.b16 %v149
    %v1015 = vunpack.c.l.b16 %v150
    %v1016 = vunpack.c.h.b16 %v150
    %v1017 = vunpack.c.l.b16 %v151
    %v1018 = vunpack.c.h.b16 %v151
    %v1019 = vunpack.c.l.b16 %v152
    %v1020 = vunpack.c.h.b16 %v152
    %v1021 = vunpack.c.l.b16 %v153
    %v1022 = vunpack.c.h.b16 %v153
    %v1023 = vunpack.c.l.b16 %v154
    %v1024 = vunpack.c.h.b16 %v154
    %v1025 = vunpack.c.l.b16 %v155
    %v1026 = vunpack.c.h.b16 %v155
    %v1027 = vunpack.c.l.b16 %v156
    %v1028 = vunpack.c.h.b16 %v156
    %v1029 = vunpack.c.l.b16 %v157
    %v1030 = vunpack.c.h.b16 %v157
    %v1031 = vunpack.c.l.b16 %v158
    %v1032 = vunpack.c.h.b16 %v158
    %v1033 = vunpack.c.l.b16 %v159
    %v1034 = vunpack.c.h.b16 %v159
    %v1035 = vunpack.c.l.b16 %v160
    %v1036 = vunpack.c.h.b16 %v160
    %v1037 = vunpack.c.l.b16 %v161
    %v1038 = vunpack.c.h.b16 %v161
    %v1039 = vunpack.c.l.b16 %v162
    %v1040 = vunpack.c.h.b16 %v162
    %v1041 = vunpack.c.l.b16 %v163
    %v1042 = vunpack.c.h.b16 %v163
    %v1043 = vunpack.c.l.b16 %v164
    %v1044 = vunpack.c.h.b16 %v164
    %v1045 = vunpack.c.l.b16 %v165
    %v1046 = vunpack.c.h.b16 %v165
    %v1047 = vunpack.c.l.b16 %v166
    %v1048 = vunpack.c.h.b16 %v166
    %v1049 = vunpack.c.l.b16 %v167
    %v1050 = vunpack.c.h.b16 %v167
    %v1051 = vunpack.c.l.b16 %v168
    %v1052 = vunpack.c.h.b16 %v168
    %v1053 = vunpack.c.l.b16 %v169
    %v1054 = vunpack.c.h.b16 %v169
    %v1055 = vunpack.c.l.b16 %v170
    %v1056 = vunpack.c.h.b16 %v170
    %v1057 = vunpack.c.l.b16 %v171
    %v1058 = vunpack.c.h.b16 %v171
    %v1059 = vunpack.c.l.b16 %v172
    %v1060 = vunpack.c.h.b16 %v172
    %v1061 = vunpack.c.l.b16 %v173
    %v1062 = vunpack.c.h.b16 %v173
    %v1063 = vunpack.c.l.b16 %v174
    %v1064 = vunpack.c.h.b16 %v174
    %v1065 = vunpack.c.l.b16 %v175
    %v1066 = vunpack.c.h.b16 %v175
    %v1067 = vunpack.c.l.b16 %v176
    %v1068 = vunpack.c.h.b16 %v176
    %v1069 = vunpack.c.l.b16 %v177
    %v1070 = vunpack.c.h.b16 %v177
    %v1071 = vunpack.c.l.b16 %v178
    %v1072 = vunpack.c.h.b16 %v178
    %v1073 = vunpack.c.l.b16 %v179
    %v1074 = vunpack.c.h.b16 %v179
    %v1075 = vunpack.c.l.b16 %v180
    %v1076 = vunpack.c.h.b16 %v180
    %v1077 = vunpack.c.l.b16 %v181
    %v1078 = vunpack.c.h.b16 %v181
    %v1079 = vunpack.c.l.b16 %v182
    %v1080 = vunpack.c.h.b16 %v182
    %v1081 = vunpack.c.l.b16 %v183
    %v1082 = vunpack.c.h.b16 %v183
    %v1083 = vunpack.c.l.b16 %v184
    %v1084 = vunpack.c.h.b16 %v184
    %v1085 = vunpack.c.l.b16 %v185
    %v1086 = vunpack.c.h.b16 %v185
    %v1087 = vunpack.c.l.b16 %v186
    %v1088 = vunpack.c.h.b16 %v186
    %v1089 = vunpack.c.l.b16 %v187
    %v1090 = vunpack.c.h.b16 %v187
    %v1091 = vunpack.c.l.b16 %v188
    %v1092 = vunpack.c.h.b16 %v188
    %v1093 = vunpack.c.l.b16 %v189
    %v1094 = vunpack.c.h.b16 %v189
    %v1095 = vunpack.c.l.b16 %v190
    %v1096 = vunpack.c.h.b16 %v190
    %v1097 = vunpack.c.l.b16 %v191
    %v1098 = vunpack.c.h.b16 %v191
    %v1099 = vunpack.c.l.b16 %v192
    %v1100 = vunpack.c.h.b16 %v192
    %v1101 = vunpack.c.l.b16 %v193
    %v1102 = vunpack.c.h.b16 %v193
    %v1103 = vunpack.c.l.b16 %v194
    %v1104 = vunpack.c.h.b16 %v194
    %v1105 = vunpack.c.l.b16 %v195
    %v1106 = vunpack.c.h.b16 %v195
    %v1107 = vunpack.c.l.b16 %v196
    %v1108 = vunpack.c.h.b16 %v196
    %v1109 = vunpack.c.l.b16 %v197
    %v1110 = vunpack.c.h.b16 %v197
    %v1111 = vunpack.c.l.b16 %v198
    %v1112 = vunpack.c.h.b16 %v198
    %v1113 = vunpack.c.l.b16 %v199
    %v1114 = vunpack.c.h.b16 %v199
    %v1115 = vunpack.c.l.b16 %v200
    %v1116 = vunpack.c.h.b16 %v200
    %v1117 = vunpack.c.l.b16 %v201
    %v1118 = vunpack.c.h.b16 %v201
    %v1119 = vunpack.c.l.b16 %v202
    %v1120 = vunpack.c.h.b16 %v202
    %v1121 = vunpack.c.l.b16 %v203
    %v1122 = vunpack.c.h.b16 %v203
    %v1123 = vunpack.c.l.b16 %v204
    %v1124 = vunpack.c.h.b16 %v204
    %v1125 = vunpack.c.l.b16 %v205
    %v1126 = vunpack.c.h.b16 %v205
    %v1127 = vunpack.c.l.b16 %v206
    %v1128 = vunpack.c.h.b16 %v206
    %v1129 = vunpack.c.l.b16 %v207
    %v1130 = vunpack.c.h.b16 %v207
    %v1131 = vunpack.c.l.b16 %v208
    %v1132 = vunpack.c.h.b16 %v208
    %v1133 = vunpack.c.l.b16 %v209
    %v1134 = vunpack.c.h.b16 %v209
    %v1135 = vunpack.c.l.b16 %v210
    %v1136 = vunpack.c.h.b16 %v210
    %v1137 = vunpack.c.l.b16 %v211
    %v1138 = vunpack.c.h.b16 %v211
    %v1139 = vunpack.c.l.b16 %v212
    %v1140 = vunpack.c.h.b16 %v212
    %v1141 = vunpack.c.l.b16 %v213
    %v1142 = vunpack.c.h.b16 %v213
    %v1143 = vunpack.c.l.b16 %v214
    %v1144 = vunpack.c.h.b16 %v214
    %v1145 = vunpack.c.l.b16 %v215
    %v1146 = vunpack.c.h.b16 %v215
    %v1147 = vunpack.c.l.b16 %v216
    %v1148 = vunpack.c.h.b16 %v216
    %v1149 = vunpack.c.l.b16 %v217
    %v1150 = vunpack.c.h.b16 %v217
    %v1151 = vunpack.c.l.b16 %v218
    %v1152 = vunpack.c.h.b16 %v218
    %v1153 = vunpack.c.l.b16 %v219
    %v1154 = vunpack.c.h.b16 %v219
    %v1155 = vunpack.c.l.b16 %v220
    %v1156 = vunpack.c.h.b16 %v220
    %v1157 = vunpack.c.l.b16 %v221
    %v1158 = vunpack.c.h.b16 %v221
    %v1159 = vunpack.c.l.b16 %v222
    %v1160 = vunpack.c.h.b16 %v222
    %v1161 = vunpack.c.l.b16 %v223
    %v1162 = vunpack.c.h.b16 %v223
    %v1163 = vunpack.c.l.b16 %v224
    %v1164 = vunpack.c.h.b16 %v224
    %v1165 = vunpack.c.l.b16 %v225
    %v1166 = vunpack.c.h.b16 %v225
    %v1167 = vunpack.c.l.b16 %v226
    %v1168 = vunpack.c.h.b16 %v226
    %v1169 = vunpack.c.l.b16 %v227
    %v1170 = vunpack.c.h.b16 %v227
    %v1171 = vunpack.c.l.b16 %v228
    %v1172 = vunpack.c.h.b16 %v228
    %v1173 = vunpack.c.l.b16 %v229
    %v1174 = vunpack.c.h.b16 %v229
    %v1175 = vunpack.c.l.b16 %v230
    %v1176 = vunpack.c.h.b16 %v230
    %v1177 = vunpack.c.l.b16 %v231
    %v1178 = vunpack.c.h.b16 %v231
    %v1179 = vunpack.c.l.b16 %v232
    %v1180 = vunpack.c.h.b16 %v232
    %v1181 = vunpack.c.l.b16 %v233
    %v1182 = vunpack.c.h.b16 %v233
    %v1183 = vunpack.c.l.b16 %v234
    %v1184 = vunpack.c.h.b16 %v234
    %v1185 = vunpack.c.l.b16 %v235
    %v1186 = vunpack.c.h.b16 %v235
    %v1187 = vunpack.c.l.b16 %v236
    %v1188 = vunpack.c.h.b16 %v236
    %v1189 = vunpack.c.l.b16 %v237
    %v1190 = vunpack.c.h.b16 %v237
    %v1191 = vunpack.c.l.b16 %v238
    %v1192 = vunpack.c.h.b16 %v238
    %v1193 = vunpack.c.l.b16 %v239
    %v1194 = vunpack.c.h.b16 %v239
    %v1195 = vunpack.c.l.b16 %v240
    %v1196 = vunpack.c.h.b16 %v240
    %v1197 = vunpack.c.l.b16 %v241
    %v1198 = vunpack.c.h.b16 %v241
    %v1199 = vunpack.c.l.b16 %v242
    %v1200 = vunpack.c.h.b16 %v242
    %v1201 = vunpack.c.l.b16 %v243
    %v1202 = vunpack.c.h.b16 %v243
    %v1203 = vunpack.c.l.b16 %v244
    %v1204 = vunpack.c.h.b16 %v244
    %v1205 = vunpack.c.l.b16 %v245
    %v1206 = vunpack.c.h.b16 %v245
    %v1207 = vunpack.c.l.b16 %v246
    %v1208 = vunpack.c.h.b16 %v246
    %v1209 = vunpack.c.l.b16 %v247
    %v1210 = vunpack.c.h.b16 %v247
    %v1211 = vunpack.c.l.b16 %v248
    %v1212 = vunpack.c.h.b16 %v248
    %v1213 = vunpack.c.l.b16 %v249
    %v1214 = vunpack.c.h.b16 %v249
    %v1215 = vunpack.c.l.b16 %v250
    %v1216 = vunpack.c.h.b16 %v250
    %v1217 = vunpack.c.l.b16 %v251
    %v1218 = vunpack.c.h.b16 %v251
    %v1219 = vunpack.c.l.b16 %v252
    %v1220 = vunpack.c.h.b16 %v252
    %v1221 = vunpack.c.l.b16 %v253
    %v1222 = vunpack.c.h.b16 %v253
    %v1223 = vunpack.c.l.b16 %v254
    %v1224 = vunpack.c.h.b16 %v254
    %v1225 = vunpack.c.l.b16 %v255
    %v1226 = vunpack.c.h.b16 %v255
    %v1227 = vunpack.c.l.b16 %v256
    %v1228 = vunpack.c.h.b16 %v256
    %v1229 = vunpack.c.l.b16 %v257
    %v1230 = vunpack.c.h.b16 %v257
    %v1231 = vunpack.c.l.b16 %v258
    %v1232 = vunpack.c.h.b16 %v258
    %v1233 = vunpack.c.l.b16 %v259
    %v1234 = vunpack.c.h.b16 %v259
    %v1235 = vunpack.c.l.b16 %v260
    %v1236 = vunpack.c.h.b16 %v260
    %v1237 = vunpack.c.l.b16 %v261
    %v1238 = vunpack.c.h.b16 %v261
    %v1239 = vunpack.c.l.b16 %v262
    %v1240 = vunpack.c.h.b16 %v262
    %v1241 = vunpack.c.l.b16 %v263
    %v1242 = vunpack.c.h.b16 %v263
    %v1243 = vunpack.c.l.b16 %v264
    %v1244 = vunpack.c.h.b16 %v264
    %v1245 = vunpack.c.l.b16 %v265
    %v1246 = vunpack.c.h.b16 %v265
    %v1247 = vunpack.c.l.b16 %v266
    %v1248 = vunpack.c.h.b16 %v266
    %v1249 = vunpack.c.l.b16 %v267
    %v1250 = vunpack.c.h.b16 %v267
    %v1251 = vunpack.c.l.b16 %v268
    %v1252 = vunpack.c.h.b16 %v268
    %v1253 = vunpack.c.l.b16 %v269
    %v1254 = vunpack.c.h.b16 %v269
    %v1255 = vunpack.c.l.b16 %v270
    %v1256 = vunpack.c.h.b16 %v270
    %v1257 = vunpack.c.l.b16 %v271
    %v1258 = vunpack.c.h.b16 %v271
    %v1259 = vunpack.c.l.b16 %v272
    %v1260 = vunpack.c.h.b16 %v272
    %v1261 = vunpack.c.l.b16 %v273
    %v1262 = vunpack.c.h.b16 %v273
    %v1263 = vunpack.c.l.b16 %v274
    %v1264 = vunpack.c.h.b16 %v274
    %v1265 = vunpack.c.l.b16 %v275
    %v1266 = vunpack.c.h.b16 %v275
    %v1267 = vunpack.c.l.b16 %v276
    %v1268 = vunpack.c.h.b16 %v276
    %v1269 = vunpack.c.l.b16 %v277
    %v1270 = vunpack.c.h.b16 %v277
    %v1271 = vunpack.c.l.b16 %v278
    %v1272 = vunpack.c.h.b16 %v278
    %v1273 = vunpack.c.l.b16 %v279
    %v1274 = vunpack.c.h.b16 %v279
    %v1275 = vunpack.c.l.b16 %v280
    %v1276 = vunpack.c.h.b16 %v280
    %v1277 = vunpack.c.l.b16 %v281
    %v1278 = vunpack.c.h.b16 %v281
    %v1279 = vunpack.c.l.b16 %v282
    %v1280 = vunpack.c.h.b16 %v282
    %v1281 = vunpack.c.l.b16 %v283
    %v1282 = vunpack.c.h.b16 %v283
    %v1283 = vunpack.c.l.b16 %v284
    %v1284 = vunpack.c.h.b16 %v284
    %v1285 = vunpack.c.l.b16 %v285
    %v1286 = vunpack.c.h.b16 %v285
    %v1287 = vunpack.c.l.b16 %v286
    %v1288 = vunpack.c.h.b16 %v286
    %v1289 = vunpack.c.l.b16 %v287
    %v1290 = vunpack.c.h.b16 %v287
    %v1291 = vunpack.c.l.b16 %v288
    %v1292 = vunpack.c.h.b16 %v288
    %v1293 = vunpack.c.l.b16 %v289
    %v1294 = vunpack.c.h.b16 %v289
    %v1295 = vunpack.c.l.b16 %v290
    %v1296 = vunpack.c.h.b16 %v290
    %v1297 = vunpack.c.l.b16 %v291
    %v1298 = vunpack.c.h.b16 %v291
    %v1299 = vunpack.c.l.b16 %v292
    %v1300 = vunpack.c.h.b16 %v292
    %v1301 = vunpack.c.l.b16 %v293
    %v1302 = vunpack.c.h.b16 %v293
    %v1303 = vunpack.c.l.b16 %v294
    %v1304 = vunpack.c.h.b16 %v294
    %v1305 = vunpack.c.l.b16 %v295
    %v1306 = vunpack.c.h.b16 %v295
    %v1307 = vunpack.c.l.b16 %v296
    %v1308 = vunpack.c.h.b16 %v296
    %v1309 = vunpack.c.l.b16 %v297
    %v1310 = vunpack.c.h.b16 %v297
    %v1311 = vunpack.c.l.b16 %v298
    %v1312 = vunpack.c.h.b16 %v298
    %v1313 = vunpack.c.l.b16 %v299
    %v1314 = vunpack.c.h.b16 %v299
    %v1315 = vunpack.c.l.b16 %v300
    %v1316 = vunpack.c.h.b16 %v300
    %v1317 = vunpack.c.l.b16 %v301
    %v1318 = vunpack.c.h.b16 %v301
    %v1319 = vunpack.c.l.b16 %v302
    %v1320 = vunpack.c.h.b16 %v302
    %v1321 = vunpack.c.l.b16 %v303
    %v1322 = vunpack.c.h.b16 %v303
    %v1323 = vunpack.c.l.b16 %v304
    %v1324 = vunpack.c.h.b16 %v304
    %v1325 = vunpack.c.l.b16 %v305
    %v1326 = vunpack.c.h.b16 %v305
    %v1327 = vunpack.c.l.b16 %v306
    %v1328 = vunpack.c.h.b16 %v306
    %v1329 = vunpack.c.l.b16 %v307
    %v1330 = vunpack.c.h.b16 %v307
    %v1331 = vunpack.c.l.b16 %v308
    %v1332 = vunpack.c.h.b16 %v308
    %v1333 = vunpack.c.l.b16 %v309
    %v1334 = vunpack.c.h.b16 %v309
    %v1335 = vunpack.c.l.b16 %v310
    %v1336 = vunpack.c.h.b16 %v310
    %v1337 = vunpack.c.l.b16 %v311
    %v1338 = vunpack.c.h.b16 %v311
    %v1339 = vunpack.c.l.b16 %v312
    %v1340 = vunpack.c.h.b16 %v312
    %v1341 = vunpack.c.l.b16 %v313
    %v1342 = vunpack.c.h.b16 %v313
    %v1343 = vunpack.c.l.b16 %v314
    %v1344 = vunpack.c.h.b16 %v314
    %v1345 = vunpack.c.l.b16 %v315
    %v1346 = vunpack.c.h.b16 %v315
    %v1347 = vunpack.c.l.b16 %v316
    %v1348 = vunpack.c.h.b16 %v316
    %v1349 = vunpack.c.l.b16 %v317
    %v1350 = vunpack.c.h.b16 %v317
    %v1351 = vunpack.c.l.b16 %v318
    %v1352 = vunpack.c.h.b16 %v318
    %v1353 = vunpack.c.l.b16 %v319
    %v1354 = vunpack.c.h.b16 %v319
    %v1355 = vunpack.c.l.b16 %v320
    %v1356 = vunpack.c.h.b16 %v320
    %v1357 = vunpack.c.l.b16 %v321
    %v1358 = vunpack.c.h.b16 %v321
    %v1359 = vunpack.c.l.b16 %v322
    %v1360 = vunpack.c.h.b16 %v322
    %v1361 = vunpack.c.l.b16 %v323
    %v1362 = vunpack.c.h.b16 %v323
    %v1363 = vunpack.c.l.b16 %v324
    %v1364 = vunpack.c.h.b16 %v324
    %v1365 = vunpack.c.l.b16 %v325
    %v1366 = vunpack.c.h.b16 %v325
    %v1367 = vunpack.c.l.b16 %v326
    %v1368 = vunpack.c.h.b16 %v326
    %v1369 = vunpack.c.l.b16 %v327
    %v1370 = vunpack.c.h.b16 %v327
    %v1371 = vunpack.c.l.b16 %v328
    %v1372 = vunpack.c.h.b16 %v328
    %v1373 = vunpack.c.l.b16 %v329
    %v1374 = vunpack.c.h.b16 %v329
    %v1375 = vunpack.c.l.b16 %v330
    %v1376 = vunpack.c.h.b16 %v330
    %v1377 = vunpack.c.l.b16 %v331
    %v1378 = vunpack.c.h.b16 %v331
    %v1379 = vunpack.c.l.b16 %v332
    %v1380 = vunpack.c.h.b16 %v332
    %v1381 = vunpack.c.l.b16 %v333
    %v1382 = vunpack.c.h.b16 %v333
    %v1383 = vunpack.c.l.b16 %v334
    %v1384 = vunpack.c.h.b16 %v334
    %v1385 = vunpack.c.l.b16 %v335
    %v1386 = vunpack.c.h.b16 %v335
    %v1387 = vunpack.c.l.b16 %v336
    %v1388 = vunpack.c.h.b16 %v336
    %v1389 = vunpack.c.l.b16 %v337
    %v1390 = vunpack.c.h.b16 %v337
    %v1391 = vunpack.c.l.b16 %v338
    %v1392 = vunpack.c.h.b16 %v338
    %v1393 = vunpack.c.l.b16 %v339
    %v1394 = vunpack.c.h.b16 %v339
    %v1395 = vunpack.c.l.b16 %v340
    %v1396 = vunpack.c.h.b16 %v340
    %v1397 = vunpack.c.l.b16 %v341
    %v1398 = vunpack.c.h.b16 %v341
    %v1399 = vunpack.c.l.b16 %v342
    %v1400 = vunpack.c.h.b16 %v342
    %v1401 = vunpack.c.l.b16 %v343
    %v1402 = vunpack.c.h.b16 %v343
    %v1403 = vunpack.c.l.b16 %v344
    %v1404 = vunpack.c.h.b16 %v344
    %v1405 = vunpack.c.l.b16 %v345
    %v1406 = vunpack.c.h.b16 %v345
    %v1407 = vunpack.c.l.b16 %v346
    %v1408 = vunpack.c.h.b16 %v346
    %v1409 = vunpack.c.l.b16 %v347
    %v1410 = vunpack.c.h.b16 %v347
    %v1411 = vunpack.c.l.b16 %v348
    %v1412 = vunpack.c.h.b16 %v348
    %v1413 = vunpack.c.l.b16 %v349
    %v1414 = vunpack.c.h.b16 %v349
    %v1415 = vunpack.c.l.b16 %v350
    %v1416 = vunpack.c.h.b16 %v350
    %v1417 = vunpack.c.l.b16 %v351
    %v1418 = vunpack.c.h.b16 %v351
    %v1419 = vunpack.c.l.b16 %v352
    %v1420 = vunpack.c.h.b16 %v352
    %v1421 = vunpack.c.l.b16 %v353
    %v1422 = vunpack.c.h.b16 %v353
    %v1423 = vunpack.c.l.b16 %v354
    %v1424 = vunpack.c.h.b16 %v354
    %v1425 = vunpack.c.l.b16 %v355
    %v1426 = vunpack.c.h.b16 %v355
    %v1427 = vunpack.c.l.b16 %v356
    %v1428 = vunpack.c.h.b16 %v356
    %v1429 = vunpack.c.l.b16 %v357
    %v1430 = vunpack.c.h.b16 %v357
    %v1431 = vunpack.c.l.b16 %v358
    %v1432 = vunpack.c.h.b16 %v358
    %v1433 = vunpack.c.l.b16 %v359
    %v1434 = vunpack.c.h.b16 %v359
    %v1435 = vunpack.c.l.b16 %v360
    %v1436 = vunpack.c.h.b16 %v360
    %v1437 = vunpack.c.l.b16 %v361
    %v1438 = vunpack.c.h.b16 %v361
    %v1439 = vunpack.c.l.b16 %v362
    %v1440 = vunpack.c.h.b16 %v362
    %v1441 = vunpack.c.l.b16 %v363
    %v1442 = vunpack.c.h.b16 %v363
    %v1443 = vunpack.c.l.b16 %v364
    %v1444 = vunpack.c.h.b16 %v364
    %v1445 = vunpack.c.l.b16 %v365
    %v1446 = vunpack.c.h.b16 %v365
    %v1447 = vunpack.c.l.b16 %v366
    %v1448 = vunpack.c.h.b16 %v366
    %v1449 = vunpack.c.l.b16 %v367
    %v1450 = vunpack.c.h.b16 %v367
    %v1451 = vunpack.c.l.b16 %v368
    %v1452 = vunpack.c.h.b16 %v368
    %v1453 = vunpack.c.l.b16 %v369
    %v1454 = vunpack.c.h.b16 %v369
    %v1455 = vunpack.c.l.b16 %v370
    %v1456 = vunpack.c.h.b16 %v370
    %v1457 = vunpack.c.l.b16 %v371
    %v1458 = vunpack.c.h.b16 %v371
    %v1459 = vunpack.c.l.b16 %v372
    %v1460 = vunpack.c.h.b16 %v372
    %v1461 = vunpack.c.l.b16 %v373
    %v1462 = vunpack.c.h.b16 %v373
    %v1463 = vunpack.c.l.b16 %v374
    %v1464 = vunpack.c.h.b16 %v374
    %v1465 = vunpack.c.l.b16 %v375
    %v1466 = vunpack.c.h.b16 %v375
    %v1467 = vunpack.c.l.b16 %v376
    %v1468 = vunpack.c.h.b16 %v376
    %v1469 = vunpack.c.l.b16 %v377
    %v1470 = vunpack.c.h.b16 %v377
    %v1471 = vunpack.c.l.b16 %v378
    %v1472 = vunpack.c.h.b16 %v378
    %v1473 = vunpack.c.l.b16 %v379
    %v1474 = vunpack.c.h.b16 %v379
    %v1475 = vunpack.c.l.b16 %v380
    %v1476 = vunpack.c.h.b16 %v380
    %v1477 = vunpack.c.l.b16 %v381
    %v1478 = vunpack.c.h.b16 %v381
    %v1479 = vunpack.c.l.b16 %v382
    %v1480 = vunpack.c.h.b16 %v382
    %v1481 = vunpack.c.l.b16 %v383
    %v1482 = vunpack.c.h.b16 %v383
    %v1483 = vunpack.c.l.b16 %v384
    %v1484 = vunpack.c.h.b16 %v384
    %v1485 = vunpack.c.l.b16 %v385
    %v1486 = vunpack.c.h.b16 %v385
    %v1487 = vunpack.c.l.b16 %v386
    %v1488 = vunpack.c.h.b16 %v386
    %v1489 = vunpack.c.l.b16 %v387
    %v1490 = vunpack.c.h.b16 %v387
    %v1491 = vunpack.c.l.b16 %v388
    %v1492 = vunpack.c.h.b16 %v388
    %v1493 = vunpack.c.l.b16 %v389
    %v1494 = vunpack.c.h.b16 %v389
    %v1495 = vunpack.c.l.b16 %v390
    %v1496 = vunpack.c.h.b16 %v390
    %v1497 = vunpack.c.l.b16 %v391
    %v1498 = vunpack.c.h.b16 %v391
    %v1499 = vunpack.c.l.b16 %v392
    %v1500 = vunpack.c.h.b16 %v392
    %v1501 = vunpack.c.l.b16 %v393
    %v1502 = vunpack.c.h.b16 %v393
    %v1503 = vunpack.c.l.b16 %v394
    %v1504 = vunpack.c.h.b16 %v394
    %v1505 = vunpack.c.l.b16 %v395
    %v1506 = vunpack.c.h.b16 %v395
    %v1507 = vunpack.c.l.b16 %v396
    %v1508 = vunpack.c.h.b16 %v396
    %v1509 = vunpack.c.l.b16 %v397
    %v1510 = vunpack.c.h.b16 %v397
    %v1511 = vunpack.c.l.b16 %v398
    %v1512 = vunpack.c.h.b16 %v398
    %v1513 = vunpack.c.l.b16 %v399
    %v1514 = vunpack.c.h.b16 %v399
    %v1515 = vunpack.c.l.b16 %v400
    %v1516 = vunpack.c.h.b16 %v400
    %v1517 = vunpack.c.l.b16 %v401
    %v1518 = vunpack.c.h.b16 %v401
    %v1519 = vunpack.c.l.b16 %v402
    %v1520 = vunpack.c.h.b16 %v402
    %v1521 = vunpack.c.l.b16 %v403
    %v1522 = vunpack.c.h.b16 %v403
    %v1523 = vunpack.c.l.b16 %v404
    %v1524 = vunpack.c.h.b16 %v404
    %v1525 = vunpack.c.l.b16 %v405
    %v1526 = vunpack.c.h.b16 %v405
    %v1527 = vunpack.c.l.b16 %v406
    %v1528 = vunpack.c.h.b16 %v406
    %v1529 = vunpack.c.l.b16 %v407
    %v1530 = vunpack.c.h.b16 %v407
    %v1531 = vunpack.c.l.b16 %v408
    %v1532 = vunpack.c.h.b16 %v408
    %v1533 = vunpack.c.l.b16 %v409
    %v1534 = vunpack.c.h.b16 %v409
    %v1535 = vunpack.c.l.b16 %v410
    %v1536 = vunpack.c.h.b16 %v410
    %v1537 = vunpack.c.l.b16 %v411
    %v1538 = vunpack.c.h.b16 %v411
    %v1539 = vunpack.c.l.b16 %v412
    %v1540 = vunpack.c.h.b16 %v412
    %v1541 = vunpack.c.l.b16 %v413
    %v1542 = vunpack.c.h.b16 %v413
    %v1543 = vunpack.c.l.b16 %v414
    %v1544 = vunpack.c.h.b16 %v414
    %v1545 = vunpack.c.l.b16 %v415
    %v1546 = vunpack.c.h.b16 %v415
    %v1547 = vunpack.c.l.b16 %v416
    %v1548 = vunpack.c.h.b16 %v416
    %v1549 = vunpack.c.l.b16 %v417
    %v1550 = vunpack.c.h.b16 %v417
    %v1551 = vunpack.c.l.b16 %v418
    %v1552 = vunpack.c.h.b16 %v418
    %v1553 = vunpack.c.l.b16 %v419
    %v1554 = vunpack.c.h.b16 %v419
    %v1555 = vunpack.c.l.b16 %v420
    %v1556 = vunpack.c.h.b16 %v420
    %v1557 = vunpack.c.l.b16 %v421
    %v1558 = vunpack.c.h.b16 %v421
    %v1559 = vunpack.c.l.b16 %v422
    %v1560 = vunpack.c.h.b16 %v422
    %v1561 = vunpack.c.l.b16 %v423
    %v1562 = vunpack.c.h.b16 %v423
    %v1563 = vunpack.c.l.b16 %v424
    %v1564 = vunpack.c.h.b16 %v424
    %v1565 = vunpack.c.l.b16 %v425
    %v1566 = vunpack.c.h.b16 %v425
    %v1567 = vunpack.c.l.b16 %v426
    %v1568 = vunpack.c.h.b16 %v426
    %v1569 = vunpack.c.l.b16 %v427
    %v1570 = vunpack.c.h.b16 %v427
    %v1571 = vunpack.c.l.b16 %v428
    %v1572 = vunpack.c.h.b16 %v428
    %v1573 = vunpack.c.l.b16 %v429
    %v1574 = vunpack.c.h.b16 %v429
    %v1575 = vunpack.c.l.b16 %v430
    %v1576 = vunpack.c.h.b16 %v430
    %v1577 = vunpack.c.l.b16 %v431
    %v1578 = vunpack.c.h.b16 %v431
    %v1579 = vunpack.c.l.b16 %v432
    %v1580 = vunpack.c.h.b16 %v432
    %v1581 = vunpack.c.l.b16 %v433
    %v1582 = vunpack.c.h.b16 %v433
    %v1583 = vunpack.c.l.b16 %v434
    %v1584 = vunpack.c.h.b16 %v434
    %v1585 = vunpack.c.l.b16 %v435
    %v1586 = vunpack.c.h.b16 %v435
    %v1587 = vunpack.c.l.b16 %v436
    %v1588 = vunpack.c.h.b16 %v436
    %v1589 = vpack.c.b16 %v829, %v821
    %v1590 = vpack.c.b16 %v830, %v822
    %v1591 = vpack.c.b16 %v831, %v823
    %v1592 = vpack.c.b16 %v832, %v824
    %v1593 = vpack.c.b16 %v833, %v825
    %v1594 = vpack.c.b16 %v834, %v826
    %v1595 = vpack.c.b16 %v835, %v827
    %v1596 = vpack.c.b16 %v836, %v828
    %v1597 = vpack.c.b16 %v845, %v837
    %v1598 = vpack.c.b16 %v846, %v838
    %v1599 = vpack.c.b16 %v847, %v839
    %v1600 = vpack.c.b16 %v848, %v840
    %v1601 = vpack.c.b16 %v849, %v841
    %v1602 = vpack.c.b16 %v850, %v842
    %v1603 = vpack.c.b16 %v851, %v843
    %v1604 = vpack.c.b16 %v852, %v844
    %v1605 = vpack.c.b16 %v861, %v853
    %v1606 = vpack.c.b16 %v862, %v854
    %v1607 = vpack.c.b16 %v863, %v855
    %v1608 = vpack.c.b16 %v864, %v856
    %v1609 = vpack.c.b16 %v865, %v857
    %v1610 = vpack.c.b16 %v866, %v858
    %v1611 = vpack.c.b16 %v867, %v859
    %v1612 = vpack.c.b16 %v868, %v860
    %v1613 = vpack.c.b16 %v877, %v869
    %v1614 = vpack.c.b16 %v878, %v870
    %v1615 = vpack.c.b16 %v879, %v871
    %v1616 = vpack.c.b16 %v880, %v872
    %v1617 = vpack.c.b16 %v881, %v873
    %v1618 = vpack.c.b16 %v882, %v874
    %v1619 = vpack.c.b16 %v883, %v875
    %v1620 = vpack.c.b16 %v884, %v876
    %v1621 = vpack.c.b16 %v893, %v885
    %v1622 = vpack.c.b16 %v894, %v886
    %v1623 = vpack.c.b16 %v895, %v887
    %v1624 = vpack.c.b16 %v896, %v888
    %v1625 = vpack.c.b16 %v897, %v889
    %v1626 = vpack.c.b16 %v898, %v890
    %v1627 = vpack.c.b16 %v899, %v891
    %v1628 = vpack.c.b16 %v900, %v892
    %v1629 = vpack.c.b16 %v909, %v901
    %v1630 = vpack.c.b16 %v910, %v902
    %v1631 = vpack.c.b16 %v911, %v903
    %v1632 = vpack.c.b16 %v912, %v904
    %v1633 = vpack.c.b16 %v913, %v905
    %v1634 = vpack.c.b16 %v914, %v906
    %v1635 = vpack.c.b16 %v915, %v907
    %v1636 = vpack.c.b16 %v916, %v908
    %v1637 = vpack.c.b16 %v925, %v917
    %v1638 = vpack.c.b16 %v926, %v918
    %v1639 = vpack.c.b16 %v927, %v919
    %v1640 = vpack.c.b16 %v928, %v920
    %v1641 = vpack.c.b16 %v929, %v921
    %v1642 = vpack.c.b16 %v930, %v922
    %v1643 = vpack.c.b16 %v931, %v923
    %v1644 = vpack.c.b16 %v932, %v924
    %v1645 = vpack.c.b16 %v941, %v933
    %v1646 = vpack.c.b16 %v942, %v934
    %v1647 = vpack.c.b16 %v943, %v935
    %v1648 = vpack.c.b16 %v944, %v936
    %v1649 = vpack.c.b16 %v945, %v937
    %v1650 = vpack.c.b16 %v946, %v938
    %v1651 = vpack.c.b16 %v947, %v939
    %v1652 = vpack.c.b16 %v948, %v940
    %v1653 = vpack.c.b16 %v957, %v949
    %v1654 = vpack.c.b16 %v958, %v950
    %v1655 = vpack.c.b16 %v959, %v951
    %v1656 = vpack.c.b16 %v960, %v952
    %v1657 = vpack.c.b16 %v961, %v953
    %v1658 = vpack.c.b16 %v962, %v954
    %v1659 = vpack.c.b16 %v963, %v955
    %v1660 = vpack.c.b16 %v964, %v956
    %v1661 = vpack.c.b16 %v973, %v965
    %v1662 = vpack.c.b16 %v974, %v966
    %v1663 = vpack.c.b16 %v975, %v967
    %v1664 = vpack.c.b16 %v976, %v968
    %v1665 = vpack.c.b16 %v977, %v969
    %v1666 = vpack.c.b16 %v978, %v970
    %v1667 = vpack.c.b16 %v979, %v971
    %v1668 = vpack.c.b16 %v980, %v972
    %v1669 = vpack.c.b16 %v989, %v981
    %v1670 = vpack.c.b16 %v990, %v982
    %v1671 = vpack.c.b16 %v991, %v983
    %v1672 = vpack.c.b16 %v992, %v984
    %v1673 = vpack.c.b16 %v993, %v985
    %v1674 = vpack.c.b16 %v994, %v986
    %v1675 = vpack.c.b16 %v995, %v987
    %v1676 = vpack.c.b16 %v996, %v988
    %v1677 = vpack.c.b16 %v1005, %v997
    %v1678 = vpack.c.b16 %v1006, %v998
    %v1679 = vpack.c.b16 %v1007, %v999
    %v1680 = vpack.c.b16 %v1008, %v1000
    %v1681 = vpack.c.b16 %v1009, %v1001
    %v1682 = vpack.c.b16 %v1010, %v1002
    %v1683 = vpack.c.b16 %v1011, %v1003
    %v1684 = vpack.c.b16 %v1012, %v1004
    %v1685 = vpack.c.b16 %v1021, %v1013
    %v1686 = vpack.c.b16 %v1022, %v1014
    %v1687 = vpack.c.b16 %v1023, %v1015
    %v1688 = vpack.c.b16 %v1024, %v1016
    %v1689 = vpack.c.b16 %v1025, %v1017
    %v1690 = vpack.c.b16 %v1026, %v1018
    %v1691 = vpack.c.b16 %v1027, %v1019
    %v1692 = vpack.c.b16 %v1028, %v1020
    %v1693 = vpack.c.b16 %v1037, %v1029
    %v1694 = vpack.c.b16 %v1038, %v1030
    %v1695 = vpack.c.b16 %v1039, %v1031
    %v1696 = vpack.c.b16 %v1040, %v1032
    %v1697 = vpack.c.b16 %v1041, %v1033
    %v1698 = vpack.c.b16 %v1042, %v1034
    %v1699 = vpack.c.b16 %v1043, %v1035
    %v1700 = vpack.c.b16 %v1044, %v1036
    %v1701 = vpack.c.b16 %v1053, %v1045
    %v1702 = vpack.c.b16 %v1054, %v1046
    %v1703 = vpack.c.b16 %v1055, %v1047
    %v1704 = vpack.c.b16 %v1056, %v1048
    %v1705 = vpack.c.b16 %v1057, %v1049
    %v1706 = vpack.c.b16 %v1058, %v1050
    %v1707 = vpack.c.b16 %v1059, %v1051
    %v1708 = vpack.c.b16 %v1060, %v1052
    %v1709 = vpack.c.b16 %v1069, %v1061
    %v1710 = vpack.c.b16 %v1070, %v1062
    %v1711 = vpack.c.b16 %v1071, %v1063
    %v1712 = vpack.c.b16 %v1072, %v1064
    %v1713 = vpack.c.b16 %v1073, %v1065
    %v1714 = vpack.c.b16 %v1074, %v1066
    %v1715 = vpack.c.b16 %v1075, %v1067
    %v1716 = vpack.c.b16 %v1076, %v1068
    %v1717 = vpack.c.b16 %v1085, %v1077
    %v1718 = vpack.c.b16 %v1086, %v1078
    %v1719 = vpack.c.b16 %v1087, %v1079
    %v1720 = vpack.c.b16 %v1088, %v1080
    %v1721 = vpack.c.b16 %v1089, %v1081
    %v1722 = vpack.c.b16 %v1090, %v1082
    %v1723 = vpack.c.b16 %v1091, %v1083
    %v1724 = vpack.c.b16 %v1092, %v1084
    %v1725 = vpack.c.b16 %v1101, %v1093
    %v1726 = vpack.c.b16 %v1102, %v1094
    %v1727 = vpack.c.b16 %v1103, %v1095
    %v1728 = vpack.c.b16 %v1104, %v1096
    %v1729 = vpack.c.b16 %v1105, %v1097
    %v1730 = vpack.c.b16 %v1106, %v1098
    %v1731 = vpack.c.b16 %v1107, %v1099
    %v1732 = vpack.c.b16 %v1108, %v1100
    %v1733 = vpack.c.b16 %v1117, %v1109
    %v1734 = vpack.c.b16 %v1118, %v1110
    %v1735 = vpack.c.b16 %v1119, %v1111
    %v1736 = vpack.c.b16 %v1120, %v1112
    %v1737 = vpack.c.b16 %v1121, %v1113
    %v1738 = vpack.c.b16 %v1122, %v1114
    %v1739 = vpack.c.b16 %v1123, %v1115
    %v1740 = vpack.c.b16 %v1124, %v1116
    %v1741 = vpack.c.b16 %v1133, %v1125
    %v1742 = vpack.c.b16 %v1134, %v1126
    %v1743 = vpack.c.b16 %v1135, %v1127
    %v1744 = vpack.c.b16 %v1136, %v1128
    %v1745 = vpack.c.b16 %v1137, %v1129
    %v1746 = vpack.c.b16 %v1138, %v1130
    %v1747 = vpack.c.b16 %v1139, %v1131
    %v1748 = vpack.c.b16 %v1140, %v1132
    %v1749 = vpack.c.b16 %v1149, %v1141
    %v1750 = vpack.c.b16 %v1150, %v1142
    %v1751 = vpack.c.b16 %v1151, %v1143
    %v1752 = vpack.c.b16 %v1152, %v1144
    %v1753 = vpack.c.b16 %v1153, %v1145
    %v1754 = vpack.c.b16 %v1154, %v1146
    %v1755 = vpack.c.b16 %v1155, %v1147
    %v1756 = vpack.c.b16 %v1156, %v1148
    %v1757 = vpack.c.b16 %v1165, %v1157
    %v1758 = vpack.c.b16 %v1166, %v1158
    %v1759 = vpack.c.b16 %v1167, %v1159
    %v1760 = vpack.c.b16 %v1168, %v1160
    %v1761 = vpack.c.b16 %v1169, %v1161
    %v1762 = vpack.c.b16 %v1170, %v1162
    %v1763 = vpack.c.b16 %v1171, %v1163
    %v1764 = vpack.c.b16 %v1172, %v1164
    %v1765 = vpack.c.b16 %v1181, %v1173
    %v1766 = vpack.c.b16 %v1182, %v1174
    %v1767 = vpack.c.b16 %v1183, %v1175
    %v1768 = vpack.c.b16 %v1184, %v1176
    %v1769 = vpack.c.b16 %v1185, %v1177
    %v1770 = vpack.c.b16 %v1186, %v1178
    %v1771 = vpack.c.b16 %v1187, %v1179
    %v1772 = vpack.c.b16 %v1188, %v1180
    %v1773 = vpack.c.b16 %v1197, %v1189
    %v1774 = vpack.c.b16 %v1198, %v1190
    %v1775 = vpack.c.b16 %v1199, %v1191
    %v1776 = vpack.c.b16 %v1200, %v1192
    %v1777 = vpack.c.b16 %v1201, %v1193
    %v1778 = vpack.c.b16 %v1202, %v1194
    %v1779 = vpack.c.b16 %v1203, %v1195
    %v1780 = vpack.c.b16 %v1204, %v1196
    %v1781 = vpack.c.b16 %v1213, %v1205
    %v1782 = vpack.c.b16 %v1214, %v1206
    %v1783 = vpack.c.b16 %v1215, %v1207
    %v1784 = vpack.c.b16 %v1216, %v1208
    %v1785 = vpack.c.b16 %v1217, %v1209
    %v1786 = vpack.c.b16 %v1218, %v1210
    %v1787 = vpack.c.b16 %v1219, %v1211
    %v1788 = vpack.c.b16 %v1220, %v1212
    %v1789 = vpack.c.b16 %v1229, %v1221
    %v1790 = vpack.c.b16 %v1230, %v1222
    %v1791 = vpack.c.b16 %v1231, %v1223
    %v1792 = vpack.c.b16 %v1232, %v1224
    %v1793 = vpack.c.b16 %v1233, %v1225
    %v1794 = vpack.c.b16 %v1234, %v1226
    %v1795 = vpack.c.b16 %v1235, %v1227
    %v1796 = vpack.c.b16 %v1236, %v1228
    %v1797 = vpack.c.b16 %v1245, %v1237
    %v1798 = vpack.c.b16 %v1246, %v1238
    %v1799 = vpack.c.b16 %v1247, %v1239
    %v1800 = vpack.c.b16 %v1248, %v1240
    %v1801 = vpack.c.b16 %v1249, %v1241
    %v1802 = vpack.c.b16 %v1250, %v1242
    %v1803 = vpack.c.b16 %v1251, %v1243
    %v1804 = vpack.c.b16 %v1252, %v1244
    %v1805 = vpack.c.b16 %v1261, %v1253
    %v1806 = vpack.c.b16 %v1262, %v1254
    %v1807 = vpack.c.b16 %v1263, %v1255
    %v1808 = vpack.c.b16 %v1264, %v1256
    %v1809 = vpack.c.b16 %v1265, %v1257
    %v1810 = vpack.c.b16 %v1266, %v1258
    %v1811 = vpack.c.b16 %v1267, %v1259
    %v1812 = vpack.c.b16 %v1268, %v1260
    %v1813 = vpack.c.b16 %v1277, %v1269
    %v1814 = vpack.c.b16 %v1278, %v1270
    %v1815 = vpack.c.b16 %v1279, %v1271
    %v1816 = vpack.c.b16 %v1280, %v1272
    %v1817 = vpack.c.b16 %v1281, %v1273
    %v1818 = vpack.c.b16 %v1282, %v1274
    %v1819 = vpack.c.b16 %v1283, %v1275
    %v1820 = vpack.c.b16 %v1284, %v1276
    %v1821 = vpack.c.b16 %v1293, %v1285
    %v1822 = vpack.c.b16 %v1294, %v1286
    %v1823 = vpack.c.b16 %v1295, %v1287
    %v1824 = vpack.c.b16 %v1296, %v1288
    %v1825 = vpack.c.b16 %v1297, %v1289
    %v1826 = vpack.c.b16 %v1298, %v1290
    %v1827 = vpack.c.b16 %v1299, %v1291
    %v1828 = vpack.c.b16 %v1300, %v1292
    %v1829 = vpack.c.b16 %v1309, %v1301
    %v1830 = vpack.c.b16 %v1310, %v1302
    %v1831 = vpack.c.b16 %v1311, %v1303
    %v1832 = vpack.c.b16 %v1312, %v1304
    %v1833 = vpack.c.b16 %v1313, %v1305
    %v1834 = vpack.c.b16 %v1314, %v1306
    %v1835 = vpack.c.b16 %v1315, %v1307
    %v1836 = vpack.c.b16 %v1316, %v1308
    %v1837 = vpack.c.b16 %v1325, %v1317
    %v1838 = vpack.c.b16 %v1326, %v1318
    %v1839 = vpack.c.b16 %v1327, %v1319
    %v1840 = vpack.c.b16 %v1328, %v1320
    %v1841 = vpack.c.b16 %v1329, %v1321
    %v1842 = vpack.c.b16 %v1330, %v1322
    %v1843 = vpack.c.b16 %v1331, %v1323
    %v1844 = vpack.c.b16 %v1332, %v1324
    %v1845 = vpack.c.b16 %v1341, %v1333
    %v1846 = vpack.c.b16 %v1342, %v1334
    %v1847 = vpack.c.b16 %v1343, %v1335
    %v1848 = vpack.c.b16 %v1344, %v1336
    %v1849 = vpack.c.b16 %v1345, %v1337
    %v1850 = vpack.c.b16 %v1346, %v1338
    %v1851 = vpack.c.b16 %v1347, %v1339
    %v1852 = vpack.c.b16 %v1348, %v1340
    %v1853 = vpack.c.b16 %v1357, %v1349
    %v1854 = vpack.c.b16 %v1358, %v1350
    %v1855 = vpack.c.b16 %v1359, %v1351
    %v1856 = vpack.c.b16 %v1360, %v1352
    %v1857 = vpack.c.b16 %v1361, %v1353
    %v1858 = vpack.c.b16 %v1362, %v1354
    %v1859 = vpack.c.b16 %v1363, %v1355
    %v1860 = vpack.c.b16 %v1364, %v1356
    %v1861 = vpack.c.b16 %v1373, %v1365
    %v1862 = vpack.c.b16 %v1374, %v1366
    %v1863 = vpack.c.b16 %v1375, %v1367
    %v1864 = vpack.c.b16 %v1376, %v1368
    %v1865 = vpack.c.b16 %v1377, %v1369
    %v1866 = vpack.c.b16 %v1378, %v1370
    %v1867 = vpack.c.b16 %v1379, %v1371
    %v1868 = vpack.c.b16 %v1380, %v1372
    %v1869 = vpack.c.b16 %v1389, %v1381
    %v1870 = vpack.c.b16 %v1390, %v1382
    %v1871 = vpack.c.b16 %v1391, %v1383
    %v1872 = vpack.c.b16 %v1392, %v1384
    %v1873 = vpack.c.b16 %v1393, %v1385
    %v1874 = vpack.c.b16 %v1394, %v1386
    %v1875 = vpack.c.b16 %v1395, %v1387
    %v1876 = vpack.c.b16 %v1396, %v1388
    %v1877 = vpack.c.b16 %v1405, %v1397
    %v1878 = vpack.c.b16 %v1406, %v1398
    %v1879 = vpack.c.b16 %v1407, %v1399
    %v1880 = vpack.c.b16 %v1408, %v1400
    %v1881 = vpack.c.b16 %v1409, %v1401
    %v1882 = vpack.c.b16 %v1410, %v1402
    %v1883 = vpack.c.b16 %v1411, %v1403
    %v1884 = vpack.c.b16 %v1412, %v1404
    %v1885 = vpack.c.b16 %v1421, %v1413
    %v1886 = vpack.c.b16 %v1422, %v1414
    %v1887 = vpack.c.b16 %v1423, %v1415
    %v1888 = vpack.c.b16 %v1424, %v1416
    %v1889 = vpack.c.b16 %v1425, %v1417
    %v1890 = vpack.c.b16 %v1426, %v1418
    %v1891 = vpack.c.b16 %v1427, %v1419
    %v1892 = vpack.c.b16 %v1428, %v1420
    %v1893 = vpack.c.b16 %v1437, %v1429
    %v1894 = vpack.c.b16 %v1438, %v1430
    %v1895 = vpack.c.b16 %v1439, %v1431
    %v1896 = vpack.c.b16 %v1440, %v1432
    %v1897 = vpack.c.b16 %v1441, %v1433
    %v1898 = vpack.c.b16 %v1442, %v1434
    %v1899 = vpack.c.b16 %v1443, %v1435
    %v1900 = vpack.c.b16 %v1444, %v1436
    %v1901 = vpack.c.b16 %v1453, %v1445
    %v1902 = vpack.c.b16 %v1454, %v1446
    %v1903 = vpack.c.b16 %v1455, %v1447
    %v1904 = vpack.c.b16 %v1456, %v1448
    %v1905 = vpack.c.b16 %v1457, %v1449
    %v1906 = vpack.c.b16 %v1458, %v1450
    %v1907 = vpack.c.b16 %v1459, %v1451
    %v1908 = vpack.c.b16 %v1460, %v1452
    %v1909 = vpack.c.b16 %v1469, %v1461
    %v1910 = vpack.c.b16 %v1470, %v1462
    %v1911 = vpack.c.b16 %v1471, %v1463
    %v1912 = vpack.c.b16 %v1472, %v1464
    %v1913 = vpack.c.b16 %v1473, %v1465
    %v1914 = vpack.c.b16 %v1474, %v1466
    %v1915 = vpack.c.b16 %v1475, %v1467
    %v1916 = vpack.c.b16 %v1476, %v1468
    %v1917 = vpack.c.b16 %v1485, %v1477
    %v1918 = vpack.c.b16 %v1486, %v1478
    %v1919 = vpack.c.b16 %v1487, %v1479
    %v1920 = vpack.c.b16 %v1488, %v1480
    %v1921 = vpack.c.b16 %v1489, %v1481
    %v1922 = vpack.c.b16 %v1490, %v1482
    %v1923 = vpack.c.b16 %v1491, %v1483
    %v1924 = vpack.c.b16 %v1492, %v1484
    %v1925 = vpack.c.b16 %v1501, %v1493
    %v1926 = vpack.c.b16 %v1502, %v1494
    %v1927 = vpack.c.b16 %v1503, %v1495
    %v1928 = vpack.c.b16 %v1504, %v1496
    %v1929 = vpack.c.b16 %v1505, %v1497
    %v1930 = vpack.c.b16 %v1506, %v1498
    %v1931 = vpack.c.b16 %v1507, %v1499
    %v1932 = vpack.c.b16 %v1508, %v1500
    %v1933 = vpack.c.b16 %v1517, %v1509
    %v1934 = vpack.c.b16 %v1518, %v1510
    %v1935 = vpack.c.b16 %v1519, %v1511
    %v1936 = vpack.c.b16 %v1520, %v1512
    %v1937 = vpack.c.b16 %v1521, %v1513
    %v1938 = vpack.c.b16 %v1522, %v1514
    %v1939 = vpack.c.b16 %v1523, %v1515
    %v1940 = vpack.c.b16 %v1524, %v1516
    %v1941 = vpack.c.b16 %v1533, %v1525
    %v1942 = vpack.c.b16 %v1534, %v1526
    %v1943 = vpack.c.b16 %v1535, %v1527
    %v1944 = vpack.c.b16 %v1536, %v1528
    %v1945 = vpack.c.b16 %v1537, %v1529
    %v1946 = vpack.c.b16 %v1538, %v1530
    %v1947 = vpack.c.b16 %v1539, %v1531
    %v1948 = vpack.c.b16 %v1540, %v1532
    %v1949 = vpack.c.b16 %v1549, %v1541
    %v1950 = vpack.c.b16 %v1550, %v1542
    %v1951 = vpack.c.b16 %v1551, %v1543
    %v1952 = vpack.c.b16 %v1552, %v1544
    %v1953 = vpack.c.b16 %v1553, %v1545
    %v1954 = vpack.c.b16 %v1554, %v1546
    %v1955 = vpack.c.b16 %v1555, %v1547
    %v1956 = vpack.c.b16 %v1556, %v1548
    %v1957 = vpack.c.b16 %v1565, %v1557
    %v1958 = vpack.c.b16 %v1566, %v1558
    %v1959 = vpack.c.b16 %v1567, %v1559
    %v1960 = vpack.c.b16 %v1568, %v1560
    %v1961 = vpack.c.b16 %v1569, %v1561
    %v1962 = vpack.c.b16 %v1570, %v1562
    %v1963 = vpack.c.b16 %v1571, %v1563
    %v1964 = vpack.c.b16 %v1572, %v1564
    %v1965 = vpack.c.b16 %v1581, %v1573
    %v1966 = vpack.c.b16 %v1582, %v1574
    %v1967 = vpack.c.b16 %v1583, %v1575
    %v1968 = vpack.c.b16 %v1584, %v1576
    %v1969 = vpack.c.b16 %v1585, %v1577
    %v1970 = vpack.c.b16 %v1586, %v1578
    %v1971 = vpack.c.b16 %v1587, %v1579
    %v1972 = vpack.c.b16 %v1588, %v1580
    %2357 = vmatprep.subr.bf16.mxu0 %v1590
    %2358 = vmatpush1.bf16.msra.mxu0 %v1589
    %2359 = vmatprep.subr.bf16.mxu0 %v1598
    %2360 = vmatpush1.bf16.msra.mxu0 %v1597
    %2361 = vmatprep.subr.bf16.mxu0 %v1606
    %2362 = vmatpush1.bf16.msra.mxu0 %v1605
    %2363 = vmatprep.subr.bf16.mxu0 %v1614
    %2364 = vmatpush1.bf16.msra.mxu0 %v1613
    %2365 = vmatprep.subr.bf16.mxu0 %v1622
    %2366 = vmatpush1.bf16.msra.mxu0 %v1621
    %2367 = vmatprep.subr.bf16.mxu0 %v1630
    %2368 = vmatpush1.bf16.msra.mxu0 %v1629
    %2369 = vmatprep.subr.bf16.mxu0 %v1638
    %2370 = vmatpush1.bf16.msra.mxu0 %v1637
    %2371 = vmatprep.subr.bf16.mxu0 %v1646
    %2372 = vmatpush1.bf16.msra.mxu0 %v1645
    %2373 = vmatprep.subr.bf16.mxu0 %v1654
    %2374 = vmatpush1.bf16.msra.mxu0 %v1653
    %2375 = vmatprep.subr.bf16.mxu0 %v1662
    %2376 = vmatpush1.bf16.msra.mxu0 %v1661
    %2377 = vmatprep.subr.bf16.mxu0 %v1670
    %2378 = vmatpush1.bf16.msra.mxu0 %v1669
    %2379 = vmatprep.subr.bf16.mxu0 %v1678
    %2380 = vmatpush1.bf16.msra.mxu0 %v1677
    %2381 = vmatprep.subr.bf16.mxu0 %v1686
    %2382 = vmatpush1.bf16.msra.mxu0 %v1685
    %2383 = vmatprep.subr.bf16.mxu0 %v1694
    %2384 = vmatpush1.bf16.msra.mxu0 %v1693
    %2385 = vmatprep.subr.bf16.mxu0 %v1702
    %2386 = vmatpush1.bf16.msra.mxu0 %v1701
    %2387 = vmatprep.subr.bf16.mxu0 %v1710
    %2388 = vmatpush1.bf16.msra.mxu0 %v1709
    %2389 = vmatprep.mubr.bf16.mxu0 %v48
    %2390 = vmatmul.mubr.bf16.gmra.mrb[0].mxu0 %v47
    %v2391 = vpop.f32.mrb[0].mxu0
    %v2392 = vadd.f32 0.0, %v2391
    %v2393 = vpop.f32.mrb[0].mxu0
    %v2394 = vadd.f32 0.0, %v2393
    %v2395 = vpop.f32.mrb[0].mxu0
    %v2396 = vpop.f32.mrb[0].mxu0
    %2397 = vdwg.mxu0
    %2398 = vmatprep.subr.bf16.mxu0 %v1718
    %2399 = vmatpush1.bf16.msra.mxu0 %v1717
    %2400 = vmatprep.subr.bf16.mxu0 %v1726
    %2401 = vmatpush1.bf16.msra.mxu0 %v1725
    %2402 = vmatprep.subr.bf16.mxu0 %v1734
    %2403 = vmatpush1.bf16.msra.mxu0 %v1733
    %2404 = vmatprep.subr.bf16.mxu0 %v1742
    %2405 = vmatpush1.bf16.msra.mxu0 %v1741
    %2406 = vmatprep.subr.bf16.mxu0 %v1750
    %2407 = vmatpush1.bf16.msra.mxu0 %v1749
    %2408 = vmatprep.subr.bf16.mxu0 %v1758
    %2409 = vmatpush1.bf16.msra.mxu0 %v1757
    %2410 = vmatprep.subr.bf16.mxu0 %v1766
    %2411 = vmatpush1.bf16.msra.mxu0 %v1765
    %2412 = vmatprep.subr.bf16.mxu0 %v1774
    %2413 = vmatpush1.bf16.msra.mxu0 %v1773
    %2414 = vmatprep.subr.bf16.mxu0 %v1782
    %2415 = vmatpush1.bf16.msra.mxu0 %v1781
    %2416 = vmatprep.subr.bf16.mxu0 %v1790
    %2417 = vmatpush1.bf16.msra.mxu0 %v1789
    %2418 = vmatprep.subr.bf16.mxu0 %v1798
    %2419 = vmatpush1.bf16.msra.mxu0 %v1797
    %2420 = vmatprep.subr.bf16.mxu0 %v1806
    %2421 = vmatpush1.bf16.msra.mxu0 %v1805
    %2422 = vmatprep.subr.bf16.mxu0 %v1814
    %2423 = vmatpush1.bf16.msra.mxu0 %v1813
    %2424 = vmatprep.subr.bf16.mxu0 %v1822
    %2425 = vmatpush1.bf16.msra.mxu0 %v1821
    %2426 = vmatprep.subr.bf16.mxu0 %v1830
    %2427 = vmatpush1.bf16.msra.mxu0 %v1829
    %2428 = vmatprep.subr.bf16.mxu0 %v1838
    %2429 = vmatpush1.bf16.msra.mxu0 %v1837
    %2430 = vmatprep.mubr.bf16.mxu0 %v50
    %2431 = vmatmul.mubr.bf16.gmra.mrb[0].mxu0 %v49
    %v2432 = vpop.f32.mrb[0].mxu0
    %v2433 = vadd.f32 %v2392, %v2432
    %v2434 = vpop.f32.mrb[0].mxu0
    %v2435 = vadd.f32 %v2394, %v2434
    %v2436 = vpop.f32.mrb[0].mxu0
    %v2437 = vpop.f32.mrb[0].mxu0
    %2438 = vdwg.mxu0
    %2439 = vmatprep.subr.bf16.mxu0 %v1846
    %2440 = vmatpush1.bf16.msra.mxu0 %v1845
    %2441 = vmatprep.subr.bf16.mxu0 %v1854
    %2442 = vmatpush1.bf16.msra.mxu0 %v1853
    %2443 = vmatprep.subr.bf16.mxu0 %v1862
    %2444 = vmatpush1.bf16.msra.mxu0 %v1861
    %2445 = vmatprep.subr.bf16.mxu0 %v1870
    %2446 = vmatpush1.bf16.msra.mxu0 %v1869
    %2447 = vmatprep.subr.bf16.mxu0 %v1878
    %2448 = vmatpush1.bf16.msra.mxu0 %v1877
    %2449 = vmatprep.subr.bf16.mxu0 %v1886
    %2450 = vmatpush1.bf16.msra.mxu0 %v1885
    %2451 = vmatprep.subr.bf16.mxu0 %v1894
    %2452 = vmatpush1.bf16.msra.mxu0 %v1893
    %2453 = vmatprep.subr.bf16.mxu0 %v1902
    %2454 = vmatpush1.bf16.msra.mxu0 %v1901
    %2455 = vmatprep.subr.bf16.mxu0 %v1910
    %2456 = vmatpush1.bf16.msra.mxu0 %v1909
    %2457 = vmatprep.subr.bf16.mxu0 %v1918
    %2458 = vmatpush1.bf16.msra.mxu0 %v1917
    %2459 = vmatprep.subr.bf16.mxu0 %v1926
    %2460 = vmatpush1.bf16.msra.mxu0 %v1925
    %2461 = vmatprep.subr.bf16.mxu0 %v1934
    %2462 = vmatpush1.bf16.msra.mxu0 %v1933
    %2463 = vmatprep.subr.bf16.mxu0 %v1942
    %2464 = vmatpush1.bf16.msra.mxu0 %v1941
    %2465 = vmatprep.subr.bf16.mxu0 %v1950
    %2466 = vmatpush1.bf16.msra.mxu0 %v1949
    %2467 = vmatprep.subr.bf16.mxu0 %v1958
    %2468 = vmatpush1.bf16.msra.mxu0 %v1957
    %2469 = vmatprep.subr.bf16.mxu0 %v1966
    %2470 = vmatpush1.bf16.msra.mxu0 %v1965
    %2471 = vmatprep.mubr.bf16.mxu0 %v52
    %2472 = vmatmul.mubr.bf16.gmra.mrb[0].mxu0 %v51
    %v2473 = vpop.f32.mrb[0].mxu0
    %v2474 = vadd.f32 %v2433, %v2473
    %v2475 = vpop.f32.mrb[0].mxu0
    %v2476 = vadd.f32 %v2435, %v2475
    %v2477 = vpop.f32.mrb[0].mxu0
    %v2478 = vpop.f32.mrb[0].mxu0
    %2479 = vdwg.mxu0
    %2480 = vmatprep.subr.bf16.mxu0 %v1592
    %2481 = vmatpush1.bf16.msra.mxu0 %v1591
    %2482 = vmatprep.subr.bf16.mxu0 %v1600
    %2483 = vmatpush1.bf16.msra.mxu0 %v1599
    %2484 = vmatprep.subr.bf16.mxu0 %v1608
    %2485 = vmatpush1.bf16.msra.mxu0 %v1607
    %2486 = vmatprep.subr.bf16.mxu0 %v1616
    %2487 = vmatpush1.bf16.msra.mxu0 %v1615
    %2488 = vmatprep.subr.bf16.mxu0 %v1624
    %2489 = vmatpush1.bf16.msra.mxu0 %v1623
    %2490 = vmatprep.subr.bf16.mxu0 %v1632
    %2491 = vmatpush1.bf16.msra.mxu0 %v1631
    %2492 = vmatprep.subr.bf16.mxu0 %v1640
    %2493 = vmatpush1.bf16.msra.mxu0 %v1639
    %2494 = vmatprep.subr.bf16.mxu0 %v1648
    %2495 = vmatpush1.bf16.msra.mxu0 %v1647
    %2496 = vmatprep.subr.bf16.mxu0 %v1656
    %2497 = vmatpush1.bf16.msra.mxu0 %v1655
    %2498 = vmatprep.subr.bf16.mxu0 %v1664
    %2499 = vmatpush1.bf16.msra.mxu0 %v1663
    %2500 = vmatprep.subr.bf16.mxu0 %v1672
    %2501 = vmatpush1.bf16.msra.mxu0 %v1671
    %2502 = vmatprep.subr.bf16.mxu0 %v1680
    %2503 = vmatpush1.bf16.msra.mxu0 %v1679
    %2504 = vmatprep.subr.bf16.mxu0 %v1688
    %2505 = vmatpush1.bf16.msra.mxu0 %v1687
    %2506 = vmatprep.subr.bf16.mxu0 %v1696
    %2507 = vmatpush1.bf16.msra.mxu0 %v1695
    %2508 = vmatprep.subr.bf16.mxu0 %v1704
    %2509 = vmatpush1.bf16.msra.mxu0 %v1703
    %2510 = vmatprep.subr.bf16.mxu0 %v1712
    %2511 = vmatpush1.bf16.msra.mxu0 %v1711
    %2512 = vmatprep.mubr.bf16.mxu0 %v48
    %2513 = vmatmul.mubr.bf16.gmra.mrb[0].mxu0 %v47
    %v2514 = vpop.f32.mrb[0].mxu0
    %v2515 = vadd.f32 0.0, %v2514
    %v2516 = vpop.f32.mrb[0].mxu0
    %v2517 = vadd.f32 0.0, %v2516
    %v2518 = vpop.f32.mrb[0].mxu0
    %v2519 = vpop.f32.mrb[0].mxu0
    %2520 = vdwg.mxu0
    %2521 = vmatprep.subr.bf16.mxu0 %v1720
    %2522 = vmatpush1.bf16.msra.mxu0 %v1719
    %2523 = vmatprep.subr.bf16.mxu0 %v1728
    %2524 = vmatpush1.bf16.msra.mxu0 %v1727
    %2525 = vmatprep.subr.bf16.mxu0 %v1736
    %2526 = vmatpush1.bf16.msra.mxu0 %v1735
    %2527 = vmatprep.subr.bf16.mxu0 %v1744
    %2528 = vmatpush1.bf16.msra.mxu0 %v1743
    %2529 = vmatprep.subr.bf16.mxu0 %v1752
    %2530 = vmatpush1.bf16.msra.mxu0 %v1751
    %2531 = vmatprep.subr.bf16.mxu0 %v1760
    %2532 = vmatpush1.bf16.msra.mxu0 %v1759
    %2533 = vmatprep.subr.bf16.mxu0 %v1768
    %2534 = vmatpush1.bf16.msra.mxu0 %v1767
    %2535 = vmatprep.subr.bf16.mxu0 %v1776
    %2536 = vmatpush1.bf16.msra.mxu0 %v1775
    %2537 = vmatprep.subr.bf16.mxu0 %v1784
    %2538 = vmatpush1.bf16.msra.mxu0 %v1783
    %2539 = vmatprep.subr.bf16.mxu0 %v1792
    %2540 = vmatpush1.bf16.msra.mxu0 %v1791
    %2541 = vmatprep.subr.bf16.mxu0 %v1800
    %2542 = vmatpush1.bf16.msra.mxu0 %v1799
    %2543 = vmatprep.subr.bf16.mxu0 %v1808
    %2544 = vmatpush1.bf16.msra.mxu0 %v1807
    %2545 = vmatprep.subr.bf16.mxu0 %v1816
    %2546 = vmatpush1.bf16.msra.mxu0 %v1815
    %2547 = vmatprep.subr.bf16.mxu0 %v1824
    %2548 = vmatpush1.bf16.msra.mxu0 %v1823
    %2549 = vmatprep.subr.bf16.mxu0 %v1832
    %2550 = vmatpush1.bf16.msra.mxu0 %v1831
    %2551 = vmatprep.subr.bf16.mxu0 %v1840
    %2552 = vmatpush1.bf16.msra.mxu0 %v1839
    %2553 = vmatprep.mubr.bf16.mxu0 %v50
    %2554 = vmatmul.mubr.bf16.gmra.mrb[0].mxu0 %v49
    %v2555 = vpop.f32.mrb[0].mxu0
    %v2556 = vadd.f32 %v2515, %v2555
    %v2557 = vpop.f32.mrb[0].mxu0
    %v2558 = vadd.f32 %v2517, %v2557
    %v2559 = vpop.f32.mrb[0].mxu0
    %v2560 = vpop.f32.mrb[0].mxu0
    %2561 = vdwg.mxu0
    %2562 = vmatprep.subr.bf16.mxu0 %v1848
    %2563 = vmatpush1.bf16.msra.mxu0 %v1847
    %2564 = vmatprep.subr.bf16.mxu0 %v1856
    %2565 = vmatpush1.bf16.msra.mxu0 %v1855
    %2566 = vmatprep.subr.bf16.mxu0 %v1864
    %2567 = vmatpush1.bf16.msra.mxu0 %v1863
    %2568 = vmatprep.subr.bf16.mxu0 %v1872
    %2569 = vmatpush1.bf16.msra.mxu0 %v1871
    %2570 = vmatprep.subr.bf16.mxu0 %v1880
    %2571 = vmatpush1.bf16.msra.mxu0 %v1879
    %2572 = vmatprep.subr.bf16.mxu0 %v1888
    %2573 = vmatpush1.bf16.msra.mxu0 %v1887
    %2574 = vmatprep.subr.bf16.mxu0 %v1896
    %2575 = vmatpush1.bf16.msra.mxu0 %v1895
    %2576 = vmatprep.subr.bf16.mxu0 %v1904
    %2577 = vmatpush1.bf16.msra.mxu0 %v1903
    %2578 = vmatprep.subr.bf16.mxu0 %v1912
    %2579 = vmatpush1.bf16.msra.mxu0 %v1911
    %2580 = vmatprep.subr.bf16.mxu0 %v1920
    %2581 = vmatpush1.bf16.msra.mxu0 %v1919
    %2582 = vmatprep.subr.bf16.mxu0 %v1928
    %2583 = vmatpush1.bf16.msra.mxu0 %v1927
    %2584 = vmatprep.subr.bf16.mxu0 %v1936
    %2585 = vmatpush1.bf16.msra.mxu0 %v1935
    %2586 = vmatprep.subr.bf16.mxu0 %v1944
    %2587 = vmatpush1.bf16.msra.mxu0 %v1943
    %2588 = vmatprep.subr.bf16.mxu0 %v1952
    %2589 = vmatpush1.bf16.msra.mxu0 %v1951
    %2590 = vmatprep.subr.bf16.mxu0 %v1960
    %2591 = vmatpush1.bf16.msra.mxu0 %v1959
    %2592 = vmatprep.subr.bf16.mxu0 %v1968
    %2593 = vmatpush1.bf16.msra.mxu0 %v1967
    %2594 = vmatprep.mubr.bf16.mxu0 %v52
    %2595 = vmatmul.mubr.bf16.gmra.mrb[0].mxu0 %v51
    %v2596 = vpop.f32.mrb[0].mxu0
    %v2597 = vadd.f32 %v2556, %v2596
    %v2598 = vpop.f32.mrb[0].mxu0
    %v2599 = vadd.f32 %v2558, %v2598
    %v2600 = vpop.f32.mrb[0].mxu0
    %v2601 = vpop.f32.mrb[0].mxu0
    %2602 = vdwg.mxu0
    %2603 = vmatprep.subr.bf16.mxu0 %v1594
    %2604 = vmatpush1.bf16.msra.mxu0 %v1593
    %2605 = vmatprep.subr.bf16.mxu0 %v1602
    %2606 = vmatpush1.bf16.msra.mxu0 %v1601
    %2607 = vmatprep.subr.bf16.mxu0 %v1610
    %2608 = vmatpush1.bf16.msra.mxu0 %v1609
    %2609 = vmatprep.subr.bf16.mxu0 %v1618
    %2610 = vmatpush1.bf16.msra.mxu0 %v1617
    %2611 = vmatprep.subr.bf16.mxu0 %v1626
    %2612 = vmatpush1.bf16.msra.mxu0 %v1625
    %2613 = vmatprep.subr.bf16.mxu0 %v1634
    %2614 = vmatpush1.bf16.msra.mxu0 %v1633
    %2615 = vmatprep.subr.bf16.mxu0 %v1642
    %2616 = vmatpush1.bf16.msra.mxu0 %v1641
    %2617 = vmatprep.subr.bf16.mxu0 %v1650
    %2618 = vmatpush1.bf16.msra.mxu0 %v1649
    %2619 = vmatprep.subr.bf16.mxu0 %v1658
    %2620 = vmatpush1.bf16.msra.mxu0 %v1657
    %2621 = vmatprep.subr.bf16.mxu0 %v1666
    %2622 = vmatpush1.bf16.msra.mxu0 %v1665
    %2623 = vmatprep.subr.bf16.mxu0 %v1674
    %2624 = vmatpush1.bf16.msra.mxu0 %v1673
    %2625 = vmatprep.subr.bf16.mxu0 %v1682
    %2626 = vmatpush1.bf16.msra.mxu0 %v1681
    %2627 = vmatprep.subr.bf16.mxu0 %v1690
    %2628 = vmatpush1.bf16.msra.mxu0 %v1689
    %2629 = vmatprep.subr.bf16.mxu0 %v1698
    %2630 = vmatpush1.bf16.msra.mxu0 %v1697
    %2631 = vmatprep.subr.bf16.mxu0 %v1706
    %2632 = vmatpush1.bf16.msra.mxu0 %v1705
    %2633 = vmatprep.subr.bf16.mxu0 %v1714
    %2634 = vmatpush1.bf16.msra.mxu0 %v1713
    %2635 = vmatprep.mubr.bf16.mxu0 %v48
    %2636 = vmatmul.mubr.bf16.gmra.mrb[0].mxu0 %v47
    %v2637 = vpop.f32.mrb[0].mxu0
    %v2638 = vadd.f32 0.0, %v2637
    %v2639 = vpop.f32.mrb[0].mxu0
    %v2640 = vadd.f32 0.0, %v2639
    %v2641 = vpop.f32.mrb[0].mxu0
    %v2642 = vpop.f32.mrb[0].mxu0
    %2643 = vdwg.mxu0
    %2644 = vmatprep.subr.bf16.mxu0 %v1722
    %2645 = vmatpush1.bf16.msra.mxu0 %v1721
    %2646 = vmatprep.subr.bf16.mxu0 %v1730
    %2647 = vmatpush1.bf16.msra.mxu0 %v1729
    %2648 = vmatprep.subr.bf16.mxu0 %v1738
    %2649 = vmatpush1.bf16.msra.mxu0 %v1737
    %2650 = vmatprep.subr.bf16.mxu0 %v1746
    %2651 = vmatpush1.bf16.msra.mxu0 %v1745
    %2652 = vmatprep.subr.bf16.mxu0 %v1754
    %2653 = vmatpush1.bf16.msra.mxu0 %v1753
    %2654 = vmatprep.subr.bf16.mxu0 %v1762
    %2655 = vmatpush1.bf16.msra.mxu0 %v1761
    %2656 = vmatprep.subr.bf16.mxu0 %v1770
    %2657 = vmatpush1.bf16.msra.mxu0 %v1769
    %2658 = vmatprep.subr.bf16.mxu0 %v1778
    %2659 = vmatpush1.bf16.msra.mxu0 %v1777
    %2660 = vmatprep.subr.bf16.mxu0 %v1786
    %2661 = vmatpush1.bf16.msra.mxu0 %v1785
    %2662 = vmatprep.subr.bf16.mxu0 %v1794
    %2663 = vmatpush1.bf16.msra.mxu0 %v1793
    %2664 = vmatprep.subr.bf16.mxu0 %v1802
    %2665 = vmatpush1.bf16.msra.mxu0 %v1801
    %2666 = vmatprep.subr.bf16.mxu0 %v1810
    %2667 = vmatpush1.bf16.msra.mxu0 %v1809
    %2668 = vmatprep.subr.bf16.mxu0 %v1818
    %2669 = vmatpush1.bf16.msra.mxu0 %v1817
    %2670 = vmatprep.subr.bf16.mxu0 %v1826
    %2671 = vmatpush1.bf16.msra.mxu0 %v1825
    %2672 = vmatprep.subr.bf16.mxu0 %v1834
    %2673 = vmatpush1.bf16.msra.mxu0 %v1833
    %2674 = vmatprep.subr.bf16.mxu0 %v1842
    %2675 = vmatpush1.bf16.msra.mxu0 %v1841
    %2676 = vmatprep.mubr.bf16.mxu0 %v50
    %2677 = vmatmul.mubr.bf16.gmra.mrb[0].mxu0 %v49
    %v2678 = vpop.f32.mrb[0].mxu0
    %v2679 = vadd.f32 %v2638, %v2678
    %v2680 = vpop.f32.mrb[0].mxu0
    %v2681 = vadd.f32 %v2640, %v2680
    %v2682 = vpop.f32.mrb[0].mxu0
    %v2683 = vpop.f32.mrb[0].mxu0
    %2684 = vdwg.mxu0
    %2685 = vmatprep.subr.bf16.mxu0 %v1850
    %2686 = vmatpush1.bf16.msra.mxu0 %v1849
    %2687 = vmatprep.subr.bf16.mxu0 %v1858
    %2688 = vmatpush1.bf16.msra.mxu0 %v1857
    %2689 = vmatprep.subr.bf16.mxu0 %v1866
    %2690 = vmatpush1.bf16.msra.mxu0 %v1865
    %2691 = vmatprep.subr.bf16.mxu0 %v1874
    %2692 = vmatpush1.bf16.msra.mxu0 %v1873
    %2693 = vmatprep.subr.bf16.mxu0 %v1882
    %2694 = vmatpush1.bf16.msra.mxu0 %v1881
    %2695 = vmatprep.subr.bf16.mxu0 %v1890
    %2696 = vmatpush1.bf16.msra.mxu0 %v1889
    %2697 = vmatprep.subr.bf16.mxu0 %v1898
    %2698 = vmatpush1.bf16.msra.mxu0 %v1897
    %2699 = vmatprep.subr.bf16.mxu0 %v1906
    %2700 = vmatpush1.bf16.msra.mxu0 %v1905
    %2701 = vmatprep.subr.bf16.mxu0 %v1914
    %2702 = vmatpush1.bf16.msra.mxu0 %v1913
    %2703 = vmatprep.subr.bf16.mxu0 %v1922
    %2704 = vmatpush1.bf16.msra.mxu0 %v1921
    %2705 = vmatprep.subr.bf16.mxu0 %v1930
    %2706 = vmatpush1.bf16.msra.mxu0 %v1929
    %2707 = vmatprep.subr.bf16.mxu0 %v1938
    %2708 = vmatpush1.bf16.msra.mxu0 %v1937
    %2709 = vmatprep.subr.bf16.mxu0 %v1946
    %2710 = vmatpush1.bf16.msra.mxu0 %v1945
    %2711 = vmatprep.subr.bf16.mxu0 %v1954
    %2712 = vmatpush1.bf16.msra.mxu0 %v1953
    %2713 = vmatprep.subr.bf16.mxu0 %v1962
    %2714 = vmatpush1.bf16.msra.mxu0 %v1961
    %2715 = vmatprep.subr.bf16.mxu0 %v1970
    %2716 = vmatpush1.bf16.msra.mxu0 %v1969
    %2717 = vmatprep.mubr.bf16.mxu0 %v52
    %2718 = vmatmul.mubr.bf16.gmra.mrb[0].mxu0 %v51
    %v2719 = vpop.f32.mrb[0].mxu0
    %v2720 = vadd.f32 %v2679, %v2719
    %v2721 = vpop.f32.mrb[0].mxu0
    %v2722 = vadd.f32 %v2681, %v2721
    %v2723 = vpop.f32.mrb[0].mxu0
    %v2724 = vpop.f32.mrb[0].mxu0
    %2725 = vdwg.mxu0
    %2726 = vmatprep.subr.bf16.mxu0 %v1596
    %2727 = vmatpush1.bf16.msra.mxu0 %v1595
    %2728 = vmatprep.subr.bf16.mxu0 %v1604
    %2729 = vmatpush1.bf16.msra.mxu0 %v1603
    %2730 = vmatprep.subr.bf16.mxu0 %v1612
    %2731 = vmatpush1.bf16.msra.mxu0 %v1611
    %2732 = vmatprep.subr.bf16.mxu0 %v1620
    %2733 = vmatpush1.bf16.msra.mxu0 %v1619
    %2734 = vmatprep.subr.bf16.mxu0 %v1628
    %2735 = vmatpush1.bf16.msra.mxu0 %v1627
    %2736 = vmatprep.subr.bf16.mxu0 %v1636
    %2737 = vmatpush1.bf16.msra.mxu0 %v1635
    %2738 = vmatprep.subr.bf16.mxu0 %v1644
    %2739 = vmatpush1.bf16.msra.mxu0 %v1643
    %2740 = vmatprep.subr.bf16.mxu0 %v1652
    %2741 = vmatpush1.bf16.msra.mxu0 %v1651
    %2742 = vmatprep.subr.bf16.mxu0 %v1660
    %2743 = vmatpush1.bf16.msra.mxu0 %v1659
    %2744 = vmatprep.subr.bf16.mxu0 %v1668
    %2745 = vmatpush1.bf16.msra.mxu0 %v1667
    %2746 = vmatprep.subr.bf16.mxu0 %v1676
    %2747 = vmatpush1.bf16.msra.mxu0 %v1675
    %2748 = vmatprep.subr.bf16.mxu0 %v1684
    %2749 = vmatpush1.bf16.msra.mxu0 %v1683
    %2750 = vmatprep.subr.bf16.mxu0 %v1692
    %2751 = vmatpush1.bf16.msra.mxu0 %v1691
    %2752 = vmatprep.subr.bf16.mxu0 %v1700
    %2753 = vmatpush1.bf16.msra.mxu0 %v1699
    %2754 = vmatprep.subr.bf16.mxu0 %v1708
    %2755 = vmatpush1.bf16.msra.mxu0 %v1707
    %2756 = vmatprep.subr.bf16.mxu0 %v1716
    %2757 = vmatpush1.bf16.msra.mxu0 %v1715
    %2758 = vmatprep.mubr.bf16.mxu0 %v48
    %2759 = vmatmul.mubr.bf16.gmra.mrb[0].mxu0 %v47
    %v2760 = vpop.f32.mrb[0].mxu0
    %v2761 = vadd.f32 0.0, %v2760
    %v2762 = vpop.f32.mrb[0].mxu0
    %v2763 = vadd.f32 0.0, %v2762
    %v2764 = vpop.f32.mrb[0].mxu0
    %v2765 = vpop.f32.mrb[0].mxu0
    %2766 = vdwg.mxu0
    %2767 = vmatprep.subr.bf16.mxu0 %v1724
    %2768 = vmatpush1.bf16.msra.mxu0 %v1723
    %2769 = vmatprep.subr.bf16.mxu0 %v1732
    %2770 = vmatpush1.bf16.msra.mxu0 %v1731
    %2771 = vmatprep.subr.bf16.mxu0 %v1740
    %2772 = vmatpush1.bf16.msra.mxu0 %v1739
    %2773 = vmatprep.subr.bf16.mxu0 %v1748
    %2774 = vmatpush1.bf16.msra.mxu0 %v1747
    %2775 = vmatprep.subr.bf16.mxu0 %v1756
    %2776 = vmatpush1.bf16.msra.mxu0 %v1755
    %2777 = vmatprep.subr.bf16.mxu0 %v1764
    %2778 = vmatpush1.bf16.msra.mxu0 %v1763
    %2779 = vmatprep.subr.bf16.mxu0 %v1772
    %2780 = vmatpush1.bf16.msra.mxu0 %v1771
    %2781 = vmatprep.subr.bf16.mxu0 %v1780
    %2782 = vmatpush1.bf16.msra.mxu0 %v1779
    %2783 = vmatprep.subr.bf16.mxu0 %v1788
    %2784 = vmatpush1.bf16.msra.mxu0 %v1787
    %2785 = vmatprep.subr.bf16.mxu0 %v1796
    %2786 = vmatpush1.bf16.msra.mxu0 %v1795
    %2787 = vmatprep.subr.bf16.mxu0 %v1804
    %2788 = vmatpush1.bf16.msra.mxu0 %v1803
    %2789 = vmatprep.subr.bf16.mxu0 %v1812
    %2790 = vmatpush1.bf16.msra.mxu0 %v1811
    %2791 = vmatprep.subr.bf16.mxu0 %v1820
    %2792 = vmatpush1.bf16.msra.mxu0 %v1819
    %2793 = vmatprep.subr.bf16.mxu0 %v1828
    %2794 = vmatpush1.bf16.msra.mxu0 %v1827
    %2795 = vmatprep.subr.bf16.mxu0 %v1836
    %2796 = vmatpush1.bf16.msra.mxu0 %v1835
    %2797 = vmatprep.subr.bf16.mxu0 %v1844
    %2798 = vmatpush1.bf16.msra.mxu0 %v1843
    %2799 = vmatprep.mubr.bf16.mxu0 %v50
    %2800 = vmatmul.mubr.bf16.gmra.mrb[0].mxu0 %v49
    %v2801 = vpop.f32.mrb[0].mxu0
    %v2802 = vadd.f32 %v2761, %v2801
    %v2803 = vpop.f32.mrb[0].mxu0
    %v2804 = vadd.f32 %v2763, %v2803
    %v2805 = vpop.f32.mrb[0].mxu0
    %v2806 = vpop.f32.mrb[0].mxu0
    %2807 = vdwg.mxu0
    %2808 = vmatprep.subr.bf16.mxu0 %v1852
    %2809 = vmatpush1.bf16.msra.mxu0 %v1851
    %2810 = vmatprep.subr.bf16.mxu0 %v1860
    %2811 = vmatpush1.bf16.msra.mxu0 %v1859
    %2812 = vmatprep.subr.bf16.mxu0 %v1868
    %2813 = vmatpush1.bf16.msra.mxu0 %v1867
    %2814 = vmatprep.subr.bf16.mxu0 %v1876
    %2815 = vmatpush1.bf16.msra.mxu0 %v1875
    %2816 = vmatprep.subr.bf16.mxu0 %v1884
    %2817 = vmatpush1.bf16.msra.mxu0 %v1883
    %2818 = vmatprep.subr.bf16.mxu0 %v1892
    %2819 = vmatpush1.bf16.msra.mxu0 %v1891
    %2820 = vmatprep.subr.bf16.mxu0 %v1900
    %2821 = vmatpush1.bf16.msra.mxu0 %v1899
    %2822 = vmatprep.subr.bf16.mxu0 %v1908
    %2823 = vmatpush1.bf16.msra.mxu0 %v1907
    %2824 = vmatprep.subr.bf16.mxu0 %v1916
    %2825 = vmatpush1.bf16.msra.mxu0 %v1915
    %2826 = vmatprep.subr.bf16.mxu0 %v1924
    %2827 = vmatpush1.bf16.msra.mxu0 %v1923
    %2828 = vmatprep.subr.bf16.mxu0 %v1932
    %2829 = vmatpush1.bf16.msra.mxu0 %v1931
    %2830 = vmatprep.subr.bf16.mxu0 %v1940
    %2831 = vmatpush1.bf16.msra.mxu0 %v1939
    %2832 = vmatprep.subr.bf16.mxu0 %v1948
    %2833 = vmatpush1.bf16.msra.mxu0 %v1947
    %2834 = vmatprep.subr.bf16.mxu0 %v1956
    %2835 = vmatpush1.bf16.msra.mxu0 %v1955
    %2836 = vmatprep.subr.bf16.mxu0 %v1964
    %2837 = vmatpush1.bf16.msra.mxu0 %v1963
    %2838 = vmatprep.subr.bf16.mxu0 %v1972
    %2839 = vmatpush1.bf16.msra.mxu0 %v1971
    %2840 = vmatprep.mubr.bf16.mxu0 %v52
    %2841 = vmatmul.mubr.bf16.gmra.mrb[0].mxu0 %v51
    %v2842 = vpop.f32.mrb[0].mxu0
    %v2843 = vadd.f32 %v2802, %v2842
    %v2844 = vpop.f32.mrb[0].mxu0
    %v2845 = vadd.f32 %v2804, %v2844
    %v2846 = vpop.f32.mrb[0].mxu0
    %v2847 = vpop.f32.mrb[0].mxu0
    %2848 = vdwg.mxu0
    %v2849 = vpack.c.bf16 %v2474, %v2474
    %v2850 = vpack.c.bf16 %v2476, %v2476
    %v2851 = vpack.c.bf16 %v2597, %v2597
    %v2852 = vpack.c.bf16 %v2599, %v2599
    %v2853 = vpack.c.bf16 %v2720, %v2720
    %v2854 = vpack.c.bf16 %v2722, %v2722
    %v2855 = vpack.c.bf16 %v2843, %v2843
    %v2856 = vpack.c.bf16 %v2845, %v2845
    %v2865 = vunpack.c.l.b16 %v2849
    %v2866 = vunpack.c.l.b16 %v2850
    %v2867 = vunpack.c.l.b16 %v2851
    %v2868 = vunpack.c.l.b16 %v2852
    %v2869 = vunpack.c.l.b16 %v2853
    %v2870 = vunpack.c.l.b16 %v2854
    %v2871 = vunpack.c.l.b16 %v2855
    %v2872 = vunpack.c.l.b16 %v2856
    %v2873 = vpack.c.b16 %v2866, %v2865
    %v2874 = vpack.c.b16 %v2868, %v2867
    %v2875 = vpack.c.b16 %v2870, %v2869
    %v2876 = vpack.c.b16 %v2872, %v2871
    %2881 = vst [vmem:[#allocation7] sm:$0xff] %v2873
    %2882 = vst [vmem:[#allocation7 + $0x8] sm:$0xff] %v2874
    %2883 = vst [vmem:[#allocation7 + $0x10] sm:$0xff] %v2875
    %2884 = vst [vmem:[#allocation7 + $0x18] sm:$0xff] %v2876
    %v2885 = vrot.slane %v2474, 4
    %v2886 = vadd.f32 %v2474, %v2885
    %v2887 = vrot.slane %v2886, 2
    %v2888 = vadd.f32 %v2886, %v2887
    %v2889 = vrot.slane %v2888, 1
    %v2890 = vadd.f32 %v2888, %v2889
    %v2891 = vrot.slane %v2476, 4
    %v2892 = vadd.f32 %v2476, %v2891
    %v2893 = vrot.slane %v2892, 2
    %v2894 = vadd.f32 %v2892, %v2893
    %v2895 = vrot.slane %v2894, 1
    %v2896 = vadd.f32 %v2894, %v2895
    %v2897 = vrot.slane %v2597, 4
    %v2898 = vadd.f32 %v2597, %v2897
    %v2899 = vrot.slane %v2898, 2
    %v2900 = vadd.f32 %v2898, %v2899
    %v2901 = vrot.slane %v2900, 1
    %v2902 = vadd.f32 %v2900, %v2901
    %v2903 = vrot.slane %v2599, 4
    %v2904 = vadd.f32 %v2599, %v2903
    %v2905 = vrot.slane %v2904, 2
    %v2906 = vadd.f32 %v2904, %v2905
    %v2907 = vrot.slane %v2906, 1
    %v2908 = vadd.f32 %v2906, %v2907
    %v2909 = vrot.slane %v2720, 4
    %v2910 = vadd.f32 %v2720, %v2909
    %v2911 = vrot.slane %v2910, 2
    %v2912 = vadd.f32 %v2910, %v2911
    %v2913 = vrot.slane %v2912, 1
    %v2914 = vadd.f32 %v2912, %v2913
    %v2915 = vrot.slane %v2722, 4
    %v2916 = vadd.f32 %v2722, %v2915
    %v2917 = vrot.slane %v2916, 2
    %v2918 = vadd.f32 %v2916, %v2917
    %v2919 = vrot.slane %v2918, 1
    %v2920 = vadd.f32 %v2918, %v2919
    %v2921 = vrot.slane %v2843, 4
    %v2922 = vadd.f32 %v2843, %v2921
    %v2923 = vrot.slane %v2922, 2
    %v2924 = vadd.f32 %v2922, %v2923
    %v2925 = vrot.slane %v2924, 1
    %v2926 = vadd.f32 %v2924, %v2925
    %v2927 = vrot.slane %v2845, 4
    %v2928 = vadd.f32 %v2845, %v2927
    %v2929 = vrot.slane %v2928, 2
    %v2930 = vadd.f32 %v2928, %v2929
    %v2931 = vrot.slane %v2930, 1
    %v2932 = vadd.f32 %v2930, %v2931
    %v2933 = vmul.f32 %v2890, 0.125
    %v2934 = vmul.f32 %v2896, 0.125
    %v2935 = vmul.f32 %v2902, 0.125
    %v2936 = vmul.f32 %v2908, 0.125
    %v2937 = vmul.f32 %v2914, 0.125
    %v2938 = vmul.f32 %v2920, 0.125
    %v2939 = vmul.f32 %v2926, 0.125
    %v2940 = vmul.f32 %v2932, 0.125
    %v2941 = vsub.f32 %v2474, %v2933
    %v2942 = vsub.f32 %v2476, %v2934
    %v2943 = vsub.f32 %v2597, %v2935
    %v2944 = vsub.f32 %v2599, %v2936
    %v2945 = vsub.f32 %v2720, %v2937
    %v2946 = vsub.f32 %v2722, %v2938
    %v2947 = vsub.f32 %v2843, %v2939
    %v2948 = vsub.f32 %v2845, %v2940
    %v2949 = vmul.f32 %v2941, %v2941
    %v2950 = vmul.f32 %v2942, %v2942
    %v2951 = vmul.f32 %v2943, %v2943
    %v2952 = vmul.f32 %v2944, %v2944
    %v2953 = vmul.f32 %v2945, %v2945
    %v2954 = vmul.f32 %v2946, %v2946
    %v2955 = vmul.f32 %v2947, %v2947
    %v2956 = vmul.f32 %v2948, %v2948
    %v2957 = vrot.slane %v2949, 4
    %v2958 = vadd.f32 %v2949, %v2957
    %v2959 = vrot.slane %v2958, 2
    %v2960 = vadd.f32 %v2958, %v2959
    %v2961 = vrot.slane %v2960, 1
    %v2962 = vadd.f32 %v2960, %v2961
    %v2963 = vrot.slane %v2950, 4
    %v2964 = vadd.f32 %v2950, %v2963
    %v2965 = vrot.slane %v2964, 2
    %v2966 = vadd.f32 %v2964, %v2965
    %v2967 = vrot.slane %v2966, 1
    %v2968 = vadd.f32 %v2966, %v2967
    %v2969 = vrot.slane %v2951, 4
    %v2970 = vadd.f32 %v2951, %v2969
    %v2971 = vrot.slane %v2970, 2
    %v2972 = vadd.f32 %v2970, %v2971
    %v2973 = vrot.slane %v2972, 1
    %v2974 = vadd.f32 %v2972, %v2973
    %v2975 = vrot.slane %v2952, 4
    %v2976 = vadd.f32 %v2952, %v2975
    %v2977 = vrot.slane %v2976, 2
    %v2978 = vadd.f32 %v2976, %v2977
    %v2979 = vrot.slane %v2978, 1
    %v2980 = vadd.f32 %v2978, %v2979
    %v2981 = vrot.slane %v2953, 4
    %v2982 = vadd.f32 %v2953, %v2981
    %v2983 = vrot.slane %v2982, 2
    %v2984 = vadd.f32 %v2982, %v2983
    %v2985 = vrot.slane %v2984, 1
    %v2986 = vadd.f32 %v2984, %v2985
    %v2987 = vrot.slane %v2954, 4
    %v2988 = vadd.f32 %v2954, %v2987
    %v2989 = vrot.slane %v2988, 2
    %v2990 = vadd.f32 %v2988, %v2989
    %v2991 = vrot.slane %v2990, 1
    %v2992 = vadd.f32 %v2990, %v2991
    %v2993 = vrot.slane %v2955, 4
    %v2994 = vadd.f32 %v2955, %v2993
    %v2995 = vrot.slane %v2994, 2
    %v2996 = vadd.f32 %v2994, %v2995
    %v2997 = vrot.slane %v2996, 1
    %v2998 = vadd.f32 %v2996, %v2997
    %v2999 = vrot.slane %v2956, 4
    %v3000 = vadd.f32 %v2956, %v2999
    %v3001 = vrot.slane %v3000, 2
    %v3002 = vadd.f32 %v3000, %v3001
    %v3003 = vrot.slane %v3002, 1
    %v3004 = vadd.f32 %v3002, %v3003
    %v3013 = vcombine.low %v2890, %v2896
    %v3014 = vcombine.low %v2902, %v2908
    %v3015 = vcombine.low %v2914, %v2920
    %v3016 = vcombine.low %v2926, %v2932
    %v3018 = vunpack.c.l.s4 1966171168
    %v3019 = vunpack.c.0.s8 %v3018
    %v3020 = vlaneseq
    %v3021 = vshrl.u32 %v3020, 7
    %v3022 = vsub.s32 %v3019, %v3021
    %v3023 = vrot.slane %v3013, %v3022
    %v3025 = vunpack.c.l.s4 1966171168
    %v3026 = vunpack.c.0.s8 %v3025
    %v3027 = vlaneseq
    %v3028 = vshrl.u32 %v3027, 7
    %v3029 = vsub.s32 %v3026, %v3028
    %v3030 = vrot.slane %v3014, %v3029
    %v3032 = vunpack.c.l.s4 1966171168
    %v3033 = vunpack.c.0.s8 %v3032
    %v3034 = vlaneseq
    %v3035 = vshrl.u32 %v3034, 7
    %v3036 = vsub.s32 %v3033, %v3035
    %v3037 = vrot.slane %v3015, %v3036
    %v3039 = vunpack.c.l.s4 1966171168
    %v3040 = vunpack.c.0.s8 %v3039
    %v3041 = vlaneseq
    %v3042 = vshrl.u32 %v3041, 7
    %v3043 = vsub.s32 %v3040, %v3042
    %v3044 = vrot.slane %v3016, %v3043
    %v3045 = vcombine.low %v3023, %v3030
    %v3046 = vcombine.low %v3037, %v3044
    %v3048 = vunpack.c.l.s4 1966171168
    %v3049 = vunpack.c.0.s8 %v3048
    %v3050 = vlaneseq
    %v3051 = vshrl.u32 %v3050, 7
    %v3052 = vsub.s32 %v3049, %v3051
    %v3053 = vrot.slane %v3045, %v3052
    %v3055 = vunpack.c.l.s4 1966171168
    %v3056 = vunpack.c.0.s8 %v3055
    %v3057 = vlaneseq
    %v3058 = vshrl.u32 %v3057, 7
    %v3059 = vsub.s32 %v3056, %v3058
    %v3060 = vrot.slane %v3046, %v3059
    %v3061 = vcombine.low %v3053, %v3060
    %3063 = vst [vmem:[#allocation8] ss:$2 sm:$0xff] %v3061
    %v3072 = vcombine.low %v2962, %v2968
    %v3073 = vcombine.low %v2974, %v2980
    %v3074 = vcombine.low %v2986, %v2992
    %v3075 = vcombine.low %v2998, %v3004
    %v3077 = vunpack.c.l.s4 1966171168
    %v3078 = vunpack.c.0.s8 %v3077
    %v3079 = vlaneseq
    %v3080 = vshrl.u32 %v3079, 7
    %v3081 = vsub.s32 %v3078, %v3080
    %v3082 = vrot.slane %v3072, %v3081
    %v3084 = vunpack.c.l.s4 1966171168
    %v3085 = vunpack.c.0.s8 %v3084
    %v3086 = vlaneseq
    %v3087 = vshrl.u32 %v3086, 7
    %v3088 = vsub.s32 %v3085, %v3087
    %v3089 = vrot.slane %v3073, %v3088
    %v3091 = vunpack.c.l.s4 1966171168
    %v3092 = vunpack.c.0.s8 %v3091
    %v3093 = vlaneseq
    %v3094 = vshrl.u32 %v3093, 7
    %v3095 = vsub.s32 %v3092, %v3094
    %v3096 = vrot.slane %v3074, %v3095
    %v3098 = vunpack.c.l.s4 1966171168
    %v3099 = vunpack.c.0.s8 %v3098
    %v3100 = vlaneseq
    %v3101 = vshrl.u32 %v3100, 7
    %v3102 = vsub.s32 %v3099, %v3101
    %v3103 = vrot.slane %v3075, %v3102
    %v3104 = vcombine.low %v3082, %v3089
    %v3105 = vcombine.low %v3096, %v3103
    %v3107 = vunpack.c.l.s4 1966171168
    %v3108 = vunpack.c.0.s8 %v3107
    %v3109 = vlaneseq
    %v3110 = vshrl.u32 %v3109, 7
    %v3111 = vsub.s32 %v3108, %v3110
    %v3112 = vrot.slane %v3104, %v3111
    %v3114 = vunpack.c.l.s4 1966171168
    %v3115 = vunpack.c.0.s8 %v3114
    %v3116 = vlaneseq
    %v3117 = vshrl.u32 %v3116, 7
    %v3118 = vsub.s32 %v3115, %v3117
    %v3119 = vrot.slane %v3105, %v3118
    %v3120 = vcombine.low %v3112, %v3119
    %s3122 = scalar_lea.vmem [#allocation8], 1
    %3123 = vst [vmem:[%s3122] ss:$2 sm:$0xff] %v3120
    // Predicated region
    $region18: #{tpu_custom_call.1} parent=1 // pred_check
      _
    $region19: #{tpu_custom_call.1} parent=1 // pred_check_branch
      %3125 = sbr.rel (0) target = $region21
    $region20: #{tpu_custom_call.1} parent=1 // pred_region
      %s3127 = ssub.s32 512, 512
      %3128 = vsyncadd [#allocation4], %s3127
      %s3130 = sshll.u32 [#allocation7], 4
      %s3131 = int_to_ptr.vmem [resolvable:$true] %s3130
      %3133 = dma.vmem_to_hbm [thread:$0]  %s3131, 512, %s2, [#allocation4]
    $region21: #{tpu_custom_call.1} parent=1 // pred_fallthru
      _
    // Predicated region
    $region22: #{tpu_custom_call.1} parent=1 // pred_check
      _
    $region23: #{tpu_custom_call.1} parent=1 // pred_check_branch
      %3135 = sbr.rel (0) target = $region25
    $region24: #{tpu_custom_call.1} parent=1 // pred_region
      %s3137 = ssub.s32 256, 256
      %3138 = vsyncadd [#allocation9], %s3137
      %s3140 = sshll.u32 [#allocation8], 4
      %s3141 = int_to_ptr.vmem [resolvable:$true] %s3140
      %3143 = dma.vmem_to_hbm [thread:$0]  %s3141, 256, %s3, [#allocation9]
    $region25: #{tpu_custom_call.1} parent=1 // pred_fallthru
      _
    // Predicated region
    $region26: #{tpu_custom_call.1} parent=1 // pred_check
      _
    $region27: #{tpu_custom_call.1} parent=1 // pred_check_branch
      %3145 = sbr.rel (0) target = $region29
    $region28: #{tpu_custom_call.1} parent=1 // pred_region
      %3146 = dma.done [#allocation4], 512
    $region29: #{tpu_custom_call.1} parent=1 // pred_fallthru
      _
    // Predicated region
    $region30: #{tpu_custom_call.1} parent=1 // pred_check
      _
    $region31: #{tpu_custom_call.1} parent=1 // pred_check_branch
      %3148 = sbr.rel (0) target = $region33
    $region32: #{tpu_custom_call.1} parent=1 // pred_region
      %3149 = dma.done [#allocation9], 256
    $region33: #{tpu_custom_call.1} parent=1 // pred_fallthru
      _
    %3150 = vsyncpa [#allocation3], 1
    %3151 = vsyncpa [#allocation6], 1
    %3152 = vsyncpa [#allocation4], 1
    %3153 = vsyncpa [#allocation9], 1

</llo_original>
